<compile_context>
chip_gen: v6e
topology: v6e:2x2x1
jax: 0.10.0
libtpu: 0.0.40
codegen_flags: <defaults>
</compile_context>

<pallas_src>
import functools

import jax
import jax.numpy as jnp
from jax.experimental import pallas as pl
from jax.experimental.pallas import tpu as pltpu


# ----------------------------------------------------------------------------
# Synthetic config (stands in for cfg.model.layers). Small MLP regressor:
#   Linear(16 -> 32), ReLU, Linear(32 -> 32), ReLU, Linear(32 -> 1)
# ----------------------------------------------------------------------------
LAYER_CFG = (
    ("Linear", 16, 32),
    ("ReLU",),
    ("Linear", 32, 32),
    ("ReLU",),
    ("Linear", 32, 1),
)

_SUBLANE = 8
_LANE = 128


def _round_up(x, m):
    return (x + m - 1) // m * m


def init_params(key, layer_cfg):
    """PyTorch-style uniform(-1/sqrt(in), 1/sqrt(in)) init; weights stored [in,out]."""
    params = []
    for spec in layer_cfg:
        if spec[0] != "Linear":
            continue
        _, fan_in, fan_out = spec
        key, kw, kb = jax.random.split(key, 3)
        bound = 1.0 / jnp.sqrt(jnp.float32(fan_in))
        w = jax.random.uniform(kw, (fan_in, fan_out), jnp.float32, -bound, bound)
        b = jax.random.uniform(kb, (1, fan_out), jnp.float32, -bound, bound)
        params.append((w, b))
    return params


# ----------------------------------------------------------------------------
# Fused MLP kernel: all Linear (MXU, bf16 operands / f32 accum) and ReLU (VPU,
# f32) layers for one batch tile run in a single VMEM pass.
# ----------------------------------------------------------------------------
def _mlp_kernel(layer_cfg, out_pad, x_ref, w_ref, b_ref, o_ref):
    linear_positions = [i for i, s in enumerate(layer_cfg) if s[0] == "Linear"]
    last_linear = linear_positions[-1]

    w_all = w_ref[...]  # (n_lin, in_pad, out_pad) bf16, VMEM-resident across steps
    b_all = b_ref[...]  # (n_lin, out_pad) f32

    h = x_ref[...].astype(jnp.float32)  # (TM, in_features)
    li = 0
    for pos, spec in enumerate(layer_cfg):
        if spec[0] == "Linear":
            _, fin, fout = spec
            # Final Linear uses the full lane-padded width (padded cols/bias are
            # zero) so the output store is lane-dense; intermediates use the
            # real width to keep vreg pressure low.
            fout_eff = out_pad if pos == last_linear else fout
            w = w_all[li, :fin, :fout_eff]          # bf16 (fin, fout_eff)
            b = b_all[li:li + 1, :fout_eff]         # f32  (1, fout_eff)
            h = jnp.dot(h.astype(jnp.bfloat16), w,
                        preferred_element_type=jnp.float32) + b
            li += 1
        elif spec[0] == "ReLU":
            h = jnp.maximum(h, 0.0)
        else:
            raise ValueError(f"Unsupported layer type: {spec[0]}")

    o_ref[...] = h.astype(o_ref.dtype)  # (TM, out_pad) lane-dense store


def swag_model_forward(x, params, layer_cfg=LAYER_CFG, block_rows=512):
    """SwagModel.forward(x) == self.model(x) as one batch-tiled Pallas kernel.

    x:      [B, in_features] float32
    params: list of (W [in,out] f32, b [1,out] f32) per Linear layer, in order.
    """
    lin_specs = [s for s in layer_cfg if s[0] == "Linear"]
    n_lin = len(lin_specs)
    in_features = lin_specs[0][1]
    out_features = lin_specs[-1][2]

    in_pad = _round_up(max(s[1] for s in lin_specs), _SUBLANE)
    out_pad = _round_up(max(s[2] for s in lin_specs), _LANE)

    # Pack all Linear params: one bf16 weight buffer + one f32 bias buffer
    # (zero padding => padded output columns are exactly zero).
    w_packed = jnp.zeros((n_lin, in_pad, out_pad), jnp.bfloat16)
    b_packed = jnp.zeros((n_lin, out_pad), jnp.float32)
    for i, (w, b) in enumerate(params):
        fin, fout = w.shape
        w_packed = w_packed.at[i, :fin, :fout].set(w.astype(jnp.bfloat16))
        b_packed = b_packed.at[i, :fout].set(b.reshape(-1).astype(jnp.float32))

    batch = x.shape[0]
    tm = min(block_rows, _round_up(batch, _SUBLANE))
    b_pad = _round_up(batch, tm)
    if b_pad != batch:
        x = jnp.pad(x, ((0, b_pad - batch), (0, 0)))
    grid = (b_pad // tm,)

    kernel = functools.partial(_mlp_kernel, layer_cfg, out_pad)

    out_padded = pl.pallas_call(
        kernel,
        out_shape=jax.ShapeDtypeStruct((b_pad, out_pad), jnp.float32),
        grid_spec=pltpu.PrefetchScalarGridSpec(
            num_scalar_prefetch=0,
            grid=grid,
            in_specs=[
                pl.BlockSpec((tm, in_features), lambda i: (i, 0)),        # x tile
                pl.BlockSpec((n_lin, in_pad, out_pad), lambda i: (0, 0, 0)),  # weights (resident)
                pl.BlockSpec((n_lin, out_pad), lambda i: (0, 0)),         # biases  (resident)
            ],
            out_specs=pl.BlockSpec((tm, out_pad), lambda i: (i, 0)),
        ),
        compiler_params=pltpu.CompilerParams(
            dimension_semantics=("parallel",)),
    )(x, w_packed, b_packed)

    return out_padded[:batch, :out_features]


# ----------------------------------------------------------------------------
# Pure-JAX references for correctness checking.
# ----------------------------------------------------------------------------
def reference_forward_f32(x, params, layer_cfg=LAYER_CFG):
    h = x
    pi = 0
    for spec in layer_cfg:
        if spec[0] == "Linear":
            w, b = params[pi]
            pi += 1
            h = h @ w + b
        elif spec[0] == "ReLU":
            h = jnp.maximum(h, 0.0)
    return h


def reference_forward_mixed(x, params, layer_cfg=LAYER_CFG):
    """Same bf16-operand / f32-accumulate recipe as the kernel."""
    h = x.astype(jnp.float32)
    pi = 0
    for spec in layer_cfg:
        if spec[0] == "Linear":
            w, b = params[pi]
            pi += 1
            h = jnp.dot(h.astype(jnp.bfloat16), w.astype(jnp.bfloat16),
                        preferred_element_type=jnp.float32) + b
        elif spec[0] == "ReLU":
            h = jnp.maximum(h, 0.0)
    return h


if __name__ == "__main__":
    key = jax.random.PRNGKey(0)
    key, kx = jax.random.split(key)

    batch = 2048
    in_features = LAYER_CFG[0][1]
    out_features = LAYER_CFG[-1][2]
    x = jax.random.normal(kx, (batch, in_features), jnp.float32)

    params = init_params(key, LAYER_CFG)

    out = swag_model_forward(x, params, block_rows=512)
    out = jax.block_until_ready(out)

    ref_mixed = reference_forward_mixed(x, params)
    ref_f32 = reference_forward_f32(x, params)

    assert out.shape == (batch, out_features), out.shape
    # Tight check against a reference using the same bf16/f32 mixed precision.
    assert jnp.allclose(out, ref_mixed, atol=1e-3, rtol=1e-3), (
        f"mismatch vs mixed-precision reference: "
        f"{float(jnp.max(jnp.abs(out - ref_mixed)))}")
    # Loose check against the pure-f32 (PyTorch-equivalent) reference.
    assert jnp.allclose(out, ref_f32, atol=5e-2, rtol=5e-2), (
        f"mismatch vs f32 reference: {float(jnp.max(jnp.abs(out - ref_f32)))}")

    print("KERNEL_OK")
</pallas_src>

<mosaic_0001>
module attributes {stable_mosaic.version = 11 : i64} {
  func.func @_mlp_kernel(%arg0: i32, %arg1: memref<512x16xf32, #tpu.memory_space<vmem>>, %arg2: memref<3x32x128xbf16, #tpu.memory_space<vmem>>, %arg3: memref<3x128xf32, #tpu.memory_space<vmem>>, %arg4: memref<512x128xf32, #tpu.memory_space<vmem>>) attributes {dimension_semantics = [#tpu.dimension_semantics<parallel>], iteration_bounds = array<i64: 4>, scalar_prefetch = 0 : i64, scratch_operands = 0 : i64, tpu.core_type = #tpu.core_type<tc>, window_params = [{transform_indices = @transform_0, window_bounds = array<i64: 512, 16>}, {pipeline_mode = #tpu.pipeline_mode<synchronous>, transform_indices = @transform_1, window_bounds = array<i64: 3, 32, 128>}, {pipeline_mode = #tpu.pipeline_mode<synchronous>, transform_indices = @transform_2, window_bounds = array<i64: 3, 128>}, {transform_indices = @transform_3, window_bounds = array<i64: 512, 128>}]} {
    %c0 = arith.constant 0 : index
    %c0_0 = arith.constant 0 : index
    %c0_1 = arith.constant 0 : index
    %0 = vector.load %arg2[%c0, %c0_0, %c0_1] : memref<3x32x128xbf16, #tpu.memory_space<vmem>>, vector<3x32x128xbf16>
    %c0_2 = arith.constant 0 : index
    %c0_3 = arith.constant 0 : index
    %1 = vector.load %arg3[%c0_2, %c0_3] : memref<3x128xf32, #tpu.memory_space<vmem>>, vector<3x128xf32>
    %c0_4 = arith.constant 0 : index
    %c0_5 = arith.constant 0 : index
    %2 = vector.load %arg1[%c0_4, %c0_5] : memref<512x16xf32, #tpu.memory_space<vmem>>, vector<512x16xf32>
    %3 = vector.extract_strided_slice %0 {offsets = [0, 0, 0], sizes = [1, 16, 32], strides = [1, 1, 1]} : vector<3x32x128xbf16> to vector<1x16x32xbf16>
    %4 = vector.shape_cast %3 : vector<1x16x32xbf16> to vector<16x32xbf16>
    %5 = vector.extract_strided_slice %1 {offsets = [0, 0], sizes = [1, 32], strides = [1, 1]} : vector<3x128xf32> to vector<1x32xf32>
    %6 = arith.truncf %2 : vector<512x16xf32> to vector<512x16xbf16>
    %cst = arith.constant dense<0.000000e+00> : vector<512x32xf32>
    %7 = tpu.matmul %6, %4, %cst {dimension_numbers = #tpu.dot_dimension_numbers<[1], [0], [0], [1], [0, 0, 1, 1], [], []>} : vector<512x16xbf16>, vector<16x32xbf16>, vector<512x32xf32> -> vector<512x32xf32>
    %8 = vector.broadcast %5 : vector<1x32xf32> to vector<512x32xf32>
    %9 = arith.addf %7, %8 : vector<512x32xf32>
    %cst_6 = arith.constant 0.000000e+00 : f32
    %10 = vector.broadcast %cst_6 : f32 to vector<512x32xf32>
    %11 = arith.maximumf %9, %10 : vector<512x32xf32>
    %12 = vector.extract_strided_slice %0 {offsets = [1, 0, 0], sizes = [1, 32, 32], strides = [1, 1, 1]} : vector<3x32x128xbf16> to vector<1x32x32xbf16>
    %13 = vector.shape_cast %12 : vector<1x32x32xbf16> to vector<32x32xbf16>
    %14 = vector.extract_strided_slice %1 {offsets = [1, 0], sizes = [1, 32], strides = [1, 1]} : vector<3x128xf32> to vector<1x32xf32>
    %15 = arith.truncf %11 : vector<512x32xf32> to vector<512x32xbf16>
    %cst_7 = arith.constant dense<0.000000e+00> : vector<512x32xf32>
    %16 = tpu.matmul %15, %13, %cst_7 {dimension_numbers = #tpu.dot_dimension_numbers<[1], [0], [0], [1], [0, 0, 1, 1], [], []>} : vector<512x32xbf16>, vector<32x32xbf16>, vector<512x32xf32> -> vector<512x32xf32>
    %17 = vector.broadcast %14 : vector<1x32xf32> to vector<512x32xf32>
    %18 = arith.addf %16, %17 : vector<512x32xf32>
    %cst_8 = arith.constant 0.000000e+00 : f32
    %19 = vector.broadcast %cst_8 : f32 to vector<512x32xf32>
    %20 = arith.maximumf %18, %19 : vector<512x32xf32>
    %21 = vector.extract_strided_slice %0 {offsets = [2, 0, 0], sizes = [1, 32, 128], strides = [1, 1, 1]} : vector<3x32x128xbf16> to vector<1x32x128xbf16>
    %22 = vector.shape_cast %21 : vector<1x32x128xbf16> to vector<32x128xbf16>
    %23 = vector.extract_strided_slice %1 {offsets = [2, 0], sizes = [1, 128], strides = [1, 1]} : vector<3x128xf32> to vector<1x128xf32>
    %24 = arith.truncf %20 : vector<512x32xf32> to vector<512x32xbf16>
    %cst_9 = arith.constant dense<0.000000e+00> : vector<512x128xf32>
    %25 = tpu.matmul %24, %22, %cst_9 {dimension_numbers = #tpu.dot_dimension_numbers<[1], [0], [0], [1], [0, 0, 1, 1], [], []>} : vector<512x32xbf16>, vector<32x128xbf16>, vector<512x128xf32> -> vector<512x128xf32>
    %26 = vector.broadcast %23 : vector<1x128xf32> to vector<512x128xf32>
    %27 = arith.addf %25, %26 : vector<512x128xf32>
    %c0_10 = arith.constant 0 : index
    %c0_11 = arith.constant 0 : index
    %28 = vector.load %arg4[%c0_10, %c0_11] : memref<512x128xf32, #tpu.memory_space<vmem>>, vector<512x128xf32>
    tpu.vector_store %arg4[%c0_10, %c0_11], %27 {strides = array<i32>} : memref<512x128xf32, #tpu.memory_space<vmem>>, vector<512x128xf32>,
    return
  }
  func.func @transform_0(%arg0: i32) -> (i32, i32) {
    %c0_i32 = arith.constant 0 : i32
    %c0_i32_0 = arith.constant 0 : i32
    return %arg0, %c0_i32 : i32, i32
  }
  func.func @transform_1(%arg0: i32) -> (i32, i32, i32) {
    %c0_i32 = arith.constant 0 : i32
    %c0_i32_0 = arith.constant 0 : i32
    %c0_i32_1 = arith.constant 0 : i32
    %c0_i32_2 = arith.constant 0 : i32
    return %c0_i32, %c0_i32_0, %c0_i32_1 : i32, i32, i32
  }
  func.func @transform_2(%arg0: i32) -> (i32, i32) {
    %c0_i32 = arith.constant 0 : i32
    %c0_i32_0 = arith.constant 0 : i32
    %c0_i32_1 = arith.constant 0 : i32
    return %c0_i32, %c0_i32_0 : i32, i32
  }
  func.func @transform_3(%arg0: i32) -> (i32, i32) {
    %c0_i32 = arith.constant 0 : i32
    %c0_i32_0 = arith.constant 0 : i32
    return %arg0, %c0_i32 : i32, i32
  }
}

</mosaic_0001>

<llo_original>
// kernel: tpu_custom_call.1
$region0: #{tpu_custom_call.1}
  #allocation0 [shape = 'u32[]', space=smem, size = 0x4, offset = 0x4, fixed_abs, tag = 'smem constant byte address 0x4 - core index']
  #allocation1 [shape = 'u32[144,128]{1,0:T(1,128)}', space=vmem, size = 0x12000, scoped, tag = 'internal scratch']
  %s0 = inlined_call_operand.vmem [shape: f32[2048,16], index: 0, kind: input, shape index: {}]
  %s1 = inlined_call_operand.vmem [shape: bf16[3,32,128], index: 1, kind: input, shape index: {}]
  %s2 = inlined_call_operand.vmem [shape: f32[3,128], index: 2, kind: input, shape index: {}]
  %s3 = inlined_call_operand.hbm [shape: f32[2048,128], index: 3, kind: output, shape index: {}]
  %s4 = sld [smem:[#allocation0]]
  $region45: #{tpu_custom_call.1} parent=0
    _
  %s6 = ssub.s32 1, %s4
  %s7 = scalar_select 0, %s6, %s4
  $region1: #{tpu_custom_call.1} parent=0
    #allocation2 [shape = 'u8[524288]{0}', space=vmem, size = 0x80000, scoped, tag = 'output window, operand 0']
    #allocation3 [shape = 's32[2]{0}', space=sflag, size = 0x8, scoped, tag = 'scoped memory for tpu_custom_call.1']
    %8 = vsyncpa [#allocation3], 0
    %s9 = scalar_lea.sflag [#allocation3], 1
    %10 = vsyncpa %s9, 0
    loop: start=0, step=1, limit=6
    $region2: #{tpu_custom_call.1} parent=1 // loop_pre_header
      _
    $region3: #{tpu_custom_call.1} parent=1 // loop_header
      %s12 = sphi 0, %s16
      %p13 = scmp.ge.s32.totalorder %s12, 6
      %s22 = sphi 0, %s24
      %s25 = sphi 0, %s22
      %s26 = sphi 0, %s25
      %s42 = sphi 0, %s26
      %s46 = sphi 0, %s46
      %s48 = sphi 0, %s46
      %s49 = sphi 0, %s48
      %s63 = sphi 0, %s49
      %s67 = sphi 0, %s67
      %s69 = sphi 0, %s67
      %s70 = sphi 0, %s69
      %s84 = sphi 0, %s70
      %s90 = sphi 0, %s92
      %s93 = sphi 0, %s90
      %s94 = sphi 0, %s93
      %s110 = sphi 0, %s94
    $region4: #{tpu_custom_call.1} parent=1 // loop_header_branch
      %15 = sbr.rel (%p13) target = $region8
    $region5: #{tpu_custom_call.1} parent=1 // loop_body
      %s17 = ssub.s32 %s12, 1
      %s18 = ssub.s32 %s12, 2
      %s19 = sadd.s32 %s12, 1
      %s20 = ssub.s32 %s12, %s19
      %p21 = scmp.eq.s32.totalorder %s20, 0
      %s23 = sadd.s32 %s22, 1
      %s24 = scalar_select %p21, %s22, %s23
      %p27 = pneg %p21
      %p28 = scmp.eq.s32.totalorder %s12, 3
      %p29 = por %p27, %p28
      %p30 = scmp.ne.s32.totalorder %s22, %s25
      %p31 = scmp.eq.s32.totalorder %s12, 0
      %p32 = por %p30, %p31
      %p33 = scmp.ne.s32.totalorder %s22, %s25
      %p34 = scmp.eq.s32.totalorder %s17, 3
      %p35 = por %p33, %p34
      %p36 = scmp.ne.s32.totalorder %s25, %s26
      %p37 = scmp.eq.s32.totalorder %s17, 0
      %p38 = por %p36, %p37
      %p39 = scmp.ne.s32.totalorder %s25, %s26
      %p40 = scmp.eq.s32.totalorder %s18, 3
      %p41 = por %p39, %p40
      %p43 = scmp.ne.s32.totalorder %s26, %s42
      %p44 = scmp.eq.s32.totalorder %s18, 0
      %p45 = por %p43, %p44
      %s47 = sadd.s32 %s46, 1
      %p50 = scmp.eq.s32.totalorder %s12, 3
      %p51 = scmp.ne.s32.totalorder %s46, %s48
      %p52 = scmp.eq.s32.totalorder %s12, 0
      %p53 = por %p51, %p52
      %p54 = scmp.ne.s32.totalorder %s46, %s48
      %p55 = scmp.eq.s32.totalorder %s17, 3
      %p56 = por %p54, %p55
      %p57 = scmp.ne.s32.totalorder %s48, %s49
      %p58 = scmp.eq.s32.totalorder %s17, 0
      %p59 = por %p57, %p58
      %p60 = scmp.ne.s32.totalorder %s48, %s49
      %p61 = scmp.eq.s32.totalorder %s18, 3
      %p62 = por %p60, %p61
      %p64 = scmp.ne.s32.totalorder %s49, %s63
      %p65 = scmp.eq.s32.totalorder %s18, 0
      %p66 = por %p64, %p65
      %s68 = sadd.s32 %s67, 1
      %p71 = scmp.eq.s32.totalorder %s12, 3
      %p72 = scmp.ne.s32.totalorder %s67, %s69
      %p73 = scmp.eq.s32.totalorder %s12, 0
      %p74 = por %p72, %p73
      %p75 = scmp.ne.s32.totalorder %s67, %s69
      %p76 = scmp.eq.s32.totalorder %s17, 3
      %p77 = por %p75, %p76
      %p78 = scmp.ne.s32.totalorder %s69, %s70
      %p79 = scmp.eq.s32.totalorder %s17, 0
      %p80 = por %p78, %p79
      %p81 = scmp.ne.s32.totalorder %s69, %s70
      %p82 = scmp.eq.s32.totalorder %s18, 3
      %p83 = por %p81, %p82
      %p85 = scmp.ne.s32.totalorder %s70, %s84
      %p86 = scmp.eq.s32.totalorder %s18, 0
      %p87 = por %p85, %p86
      %s88 = ssub.s32 %s12, %s19
      %p89 = scmp.eq.s32.totalorder %s88, 0
      %s91 = sadd.s32 %s90, 1
      %s92 = scalar_select %p89, %s90, %s91
      %p95 = pneg %p89
      %p96 = scmp.eq.s32.totalorder %s12, 3
      %p97 = por %p95, %p96
      %p98 = scmp.ne.s32.totalorder %s90, %s93
      %p99 = scmp.eq.s32.totalorder %s12, 0
      %p100 = por %p98, %p99
      %p101 = scmp.ne.s32.totalorder %s90, %s93
      %p102 = scmp.eq.s32.totalorder %s17, 3
      %p103 = por %p101, %p102
      %p104 = scmp.ne.s32.totalorder %s93, %s94
      %p105 = scmp.eq.s32.totalorder %s17, 0
      %p106 = por %p104, %p105
      %p107 = scmp.ne.s32.totalorder %s93, %s94
      %p108 = scmp.eq.s32.totalorder %s18, 3
      %p109 = por %p107, %p108
      %p111 = scmp.ne.s32.totalorder %s94, %s110
      %p112 = scmp.eq.s32.totalorder %s18, 0
      %p113 = por %p111, %p112
      %p114 = scmp.le.s32.totalorder 1, %s12
      %p115 = scmp.lt.s32.totalorder %s12, 5
      %p116 = pnand %p114, %p115
      %p117 = pneg %p116
      // Predicated region
      $region9: #{tpu_custom_call.1} parent=5 // pred_check
        _
      $region10: #{tpu_custom_call.1} parent=5 // pred_check_branch
        %119 = sbr.rel (%p116) target = $region12
      $region11: #{tpu_custom_call.1} parent=5 // pred_region
        %s120 = ssub.s32 %s12, 1
        // Predicated region
        $region13: #{tpu_custom_call.1} parent=11 // pred_check
          %p121 = pneg %p59
        $region14: #{tpu_custom_call.1} parent=11 // pred_check_branch
          %123 = sbr.rel (%p121) target = $region16
        $region15: #{tpu_custom_call.1} parent=11 // pred_region
          _
        $region16: #{tpu_custom_call.1} parent=11 // pred_fallthru
          _
        // Predicated region
        $region17: #{tpu_custom_call.1} parent=11 // pred_check
          %p124 = pneg %p80
        $region18: #{tpu_custom_call.1} parent=11 // pred_check_branch
          %126 = sbr.rel (%p124) target = $region20
        $region19: #{tpu_custom_call.1} parent=11 // pred_region
          _
        $region20: #{tpu_custom_call.1} parent=11 // pred_fallthru
          _
      $region12: #{tpu_custom_call.1} parent=5 // pred_fallthru
        _
      %p127 = scmp.lt.s32.totalorder %s12, 4
      // Predicated region
      $region21: #{tpu_custom_call.1} parent=5 // pred_check
        %p128 = pneg %p127
      $region22: #{tpu_custom_call.1} parent=5 // pred_check_branch
        %130 = sbr.rel (%p128) target = $region24
      $region23: #{tpu_custom_call.1} parent=5 // pred_region
        // Predicated region
        $region25: #{tpu_custom_call.1} parent=23 // pred_check
          %p131 = pneg %p32
        $region26: #{tpu_custom_call.1} parent=23 // pred_check_branch
          %133 = sbr.rel (%p131) target = $region28
        $region27: #{tpu_custom_call.1} parent=23 // pred_region
          %s134 = smul.u32 64, %s12
          %p135 = scmp.lt.s32.totalorder %s134, 255
          %s136 = scalar_select %p135, %s134, 255
          %s137 = smul.addr %s136, 8
          %s138 = scalar_lea.vmem %s0, %s137
          %s139 = smul.u32 64, %s12
        $region28: #{tpu_custom_call.1} parent=23 // pred_fallthru
          _
      $region24: #{tpu_custom_call.1} parent=5 // pred_fallthru
        _
      %p140 = scmp.le.s32.totalorder 1, %s12
      %p141 = scmp.lt.s32.totalorder %s12, 5
      %p142 = pnand %p140, %p141
      %p143 = pneg %p142
      // Predicated region
      $region29: #{tpu_custom_call.1} parent=5 // pred_check
        _
      $region30: #{tpu_custom_call.1} parent=5 // pred_check_branch
        %145 = sbr.rel (%p142) target = $region32
      $region31: #{tpu_custom_call.1} parent=5 // pred_region
        %s146 = ssub.s32 %s12, 1
        %s147 = smul.u32 64, %s17
        %p148 = scmp.lt.s32.totalorder %s147, 255
        %s149 = scalar_select %p148, %s147, 255
        %s150 = smul.addr %s149, 8
        %s151 = scalar_lea.vmem %s0, %s150
        %p152 = pneg %p38
        %p153 = pneg %p35
        %p154 = pneg %p59
        %p155 = pneg %p56
        %p156 = pneg %p80
        %p157 = pneg %p77
        %p158 = pneg %p106
        %p159 = pneg %p103
        %s160 = sand.u32 %s93, 1
        %s161 = scalar_lea.sflag [#allocation3], %s160
        %s162 = sand.u32 %s93, 1
        %s163 = smul.addr %s162, 512
        %s164 = scalar_lea.vmem [#allocation2], %s163
        %s165 = smul.u32 64, %s17
        %p166 = scmp.lt.s32.totalorder %s165, 255
        %s167 = scalar_select %p166, %s165, 255
        %s168 = smul.addr %s167, 8
        %s169 = scalar_lea.vmem %s0, %s168
        %s170 = smul.u32 64, %s17
        %s171 = smul.u32 64, %s17
        %v173 = vld [vmem:[%s1] sm:$0xf]
        %v174 = vld [vmem:[%s1 + $0x4] sm:$0xf]
        %v175 = vld [vmem:[%s1 + $0x10] sm:$0xf]
        %v176 = vld [vmem:[%s1 + $0x14] sm:$0xf]
        %v177 = vld [vmem:[%s1 + $0x18] sm:$0xf]
        %v178 = vld [vmem:[%s1 + $0x1c] sm:$0xf]
        %v179 = vld [vmem:[%s1 + $0x20] sm:$0xf]
        %v180 = vld [vmem:[%s1 + $0x24] sm:$0xf]
        %v181 = vld [vmem:[%s1 + $0x28] sm:$0xf]
        %v182 = vld [vmem:[%s1 + $0x2c] sm:$0xf]
        %v183 = vld [vmem:[%s2] sm:$0x7]
        %v184 = vld [vmem:[%s169] sm:$0xff]
        %v185 = vld [vmem:[%s169 + $0x8] sm:$0xff]
        %v186 = vld [vmem:[%s169 + $0x10] sm:$0xff]
        %v187 = vld [vmem:[%s169 + $0x18] sm:$0xff]
        %v188 = vld [vmem:[%s169 + $0x20] sm:$0xff]
        %v189 = vld [vmem:[%s169 + $0x28] sm:$0xff]
        %v190 = vld [vmem:[%s169 + $0x30] sm:$0xff]
        %v191 = vld [vmem:[%s169 + $0x38] sm:$0xff]
        %v192 = vld [vmem:[%s169 + $0x40] sm:$0xff]
        %v193 = vld [vmem:[%s169 + $0x48] sm:$0xff]
        %v194 = vld [vmem:[%s169 + $0x50] sm:$0xff]
        %v195 = vld [vmem:[%s169 + $0x58] sm:$0xff]
        %v196 = vld [vmem:[%s169 + $0x60] sm:$0xff]
        %v197 = vld [vmem:[%s169 + $0x68] sm:$0xff]
        %v198 = vld [vmem:[%s169 + $0x70] sm:$0xff]
        %v199 = vld [vmem:[%s169 + $0x78] sm:$0xff]
        %v200 = vld [vmem:[%s169 + $0x80] sm:$0xff]
        %v201 = vld [vmem:[%s169 + $0x88] sm:$0xff]
        %v202 = vld [vmem:[%s169 + $0x90] sm:$0xff]
        %v203 = vld [vmem:[%s169 + $0x98] sm:$0xff]
        %v204 = vld [vmem:[%s169 + $0xa0] sm:$0xff]
        %v205 = vld [vmem:[%s169 + $0xa8] sm:$0xff]
        %v206 = vld [vmem:[%s169 + $0xb0] sm:$0xff]
        %v207 = vld [vmem:[%s169 + $0xb8] sm:$0xff]
        %v208 = vld [vmem:[%s169 + $0xc0] sm:$0xff]
        %v209 = vld [vmem:[%s169 + $0xc8] sm:$0xff]
        %v210 = vld [vmem:[%s169 + $0xd0] sm:$0xff]
        %v211 = vld [vmem:[%s169 + $0xd8] sm:$0xff]
        %v212 = vld [vmem:[%s169 + $0xe0] sm:$0xff]
        %v213 = vld [vmem:[%s169 + $0xe8] sm:$0xff]
        %v214 = vld [vmem:[%s169 + $0xf0] sm:$0xff]
        %v215 = vld [vmem:[%s169 + $0xf8] sm:$0xff]
        %v216 = vld [vmem:[%s169 + $0x100] sm:$0xff]
        %v217 = vld [vmem:[%s169 + $0x108] sm:$0xff]
        %v218 = vld [vmem:[%s169 + $0x110] sm:$0xff]
        %v219 = vld [vmem:[%s169 + $0x118] sm:$0xff]
        %v220 = vld [vmem:[%s169 + $0x120] sm:$0xff]
        %v221 = vld [vmem:[%s169 + $0x128] sm:$0xff]
        %v222 = vld [vmem:[%s169 + $0x130] sm:$0xff]
        %v223 = vld [vmem:[%s169 + $0x138] sm:$0xff]
        %v224 = vld [vmem:[%s169 + $0x140] sm:$0xff]
        %v225 = vld [vmem:[%s169 + $0x148] sm:$0xff]
        %v226 = vld [vmem:[%s169 + $0x150] sm:$0xff]
        %v227 = vld [vmem:[%s169 + $0x158] sm:$0xff]
        %v228 = vld [vmem:[%s169 + $0x160] sm:$0xff]
        %v229 = vld [vmem:[%s169 + $0x168] sm:$0xff]
        %v230 = vld [vmem:[%s169 + $0x170] sm:$0xff]
        %v231 = vld [vmem:[%s169 + $0x178] sm:$0xff]
        %v232 = vld [vmem:[%s169 + $0x180] sm:$0xff]
        %v233 = vld [vmem:[%s169 + $0x188] sm:$0xff]
        %v234 = vld [vmem:[%s169 + $0x190] sm:$0xff]
        %v235 = vld [vmem:[%s169 + $0x198] sm:$0xff]
        %v236 = vld [vmem:[%s169 + $0x1a0] sm:$0xff]
        %v237 = vld [vmem:[%s169 + $0x1a8] sm:$0xff]
        %v238 = vld [vmem:[%s169 + $0x1b0] sm:$0xff]
        %v239 = vld [vmem:[%s169 + $0x1b8] sm:$0xff]
        %v240 = vld [vmem:[%s169 + $0x1c0] sm:$0xff]
        %v241 = vld [vmem:[%s169 + $0x1c8] sm:$0xff]
        %v242 = vld [vmem:[%s169 + $0x1d0] sm:$0xff]
        %v243 = vld [vmem:[%s169 + $0x1d8] sm:$0xff]
        %v244 = vld [vmem:[%s169 + $0x1e0] sm:$0xff]
        %v245 = vld [vmem:[%s169 + $0x1e8] sm:$0xff]
        %v246 = vld [vmem:[%s169 + $0x1f0] sm:$0xff]
        %v247 = vld [vmem:[%s169 + $0x1f8] sm:$0xff]
        %v248 = vpack.c.bf16 %v185, %v184
        %v249 = vpack.c.bf16 %v187, %v186
        %v250 = vpack.c.bf16 %v189, %v188
        %v251 = vpack.c.bf16 %v191, %v190
        %v252 = vpack.c.bf16 %v193, %v192
        %v253 = vpack.c.bf16 %v195, %v194
        %v254 = vpack.c.bf16 %v197, %v196
        %v255 = vpack.c.bf16 %v199, %v198
        %v256 = vpack.c.bf16 %v201, %v200
        %v257 = vpack.c.bf16 %v203, %v202
        %v258 = vpack.c.bf16 %v205, %v204
        %v259 = vpack.c.bf16 %v207, %v206
        %v260 = vpack.c.bf16 %v209, %v208
        %v261 = vpack.c.bf16 %v211, %v210
        %v262 = vpack.c.bf16 %v213, %v212
        %v263 = vpack.c.bf16 %v215, %v214
        %v264 = vpack.c.bf16 %v217, %v216
        %v265 = vpack.c.bf16 %v219, %v218
        %v266 = vpack.c.bf16 %v221, %v220
        %v267 = vpack.c.bf16 %v223, %v222
        %v268 = vpack.c.bf16 %v225, %v224
        %v269 = vpack.c.bf16 %v227, %v226
        %v270 = vpack.c.bf16 %v229, %v228
        %v271 = vpack.c.bf16 %v231, %v230
        %v272 = vpack.c.bf16 %v233, %v232
        %v273 = vpack.c.bf16 %v235, %v234
        %v274 = vpack.c.bf16 %v237, %v236
        %v275 = vpack.c.bf16 %v239, %v238
        %v276 = vpack.c.bf16 %v241, %v240
        %v277 = vpack.c.bf16 %v243, %v242
        %v278 = vpack.c.bf16 %v245, %v244
        %v279 = vpack.c.bf16 %v247, %v246
        %v280 = vlaneseq
        %v281 = vshrl.u32 %v280, 7
        %v282 = vsub.s32 0, %v281
        %v283 = vrot.slane %v183, %v282
        %v286 = vunpack.c.l.b16 %v173
        %v287 = vunpack.c.l.b16 %v174
        %v288 = vpack.c.b16 %v287, %v286
        %vm290 = vcmask 130048
        %v292 = vsel %vm290, %v248, 0
        %v295 = vsel %vm290, %v249, 0
        %v298 = vsel %vm290, %v250, 0
        %v301 = vsel %vm290, %v251, 0
        %v304 = vsel %vm290, %v252, 0
        %v307 = vsel %vm290, %v253, 0
        %v310 = vsel %vm290, %v254, 0
        %v313 = vsel %vm290, %v255, 0
        %v316 = vsel %vm290, %v256, 0
        %v319 = vsel %vm290, %v257, 0
        %v322 = vsel %vm290, %v258, 0
        %v325 = vsel %vm290, %v259, 0
        %v328 = vsel %vm290, %v260, 0
        %v331 = vsel %vm290, %v261, 0
        %v334 = vsel %vm290, %v262, 0
        %v337 = vsel %vm290, %v263, 0
        %v340 = vsel %vm290, %v264, 0
        %v343 = vsel %vm290, %v265, 0
        %v346 = vsel %vm290, %v266, 0
        %v349 = vsel %vm290, %v267, 0
        %v352 = vsel %vm290, %v268, 0
        %v355 = vsel %vm290, %v269, 0
        %v358 = vsel %vm290, %v270, 0
        %v361 = vsel %vm290, %v271, 0
        %v364 = vsel %vm290, %v272, 0
        %v367 = vsel %vm290, %v273, 0
        %v370 = vsel %vm290, %v274, 0
        %v373 = vsel %vm290, %v275, 0
        %v376 = vsel %vm290, %v276, 0
        %v379 = vsel %vm290, %v277, 0
        %v382 = vsel %vm290, %v278, 0
        %v385 = vsel %vm290, %v279, 0
        %387 = vmatprep.subr.bf16.mxu0 0
        %388 = vmatpush1.bf16.msra.mxu0 0
        %389 = vmatprep.subr.bf16.mxu0 0
        %390 = vmatpush1.bf16.msra.mxu0 0
        %391 = vmatprep.subr.bf16.mxu0 0
        %392 = vmatpush1.bf16.msra.mxu0 0
        %393 = vmatprep.subr.bf16.mxu0 0
        %394 = vmatpush1.bf16.msra.mxu0 0
        %395 = vmatprep.subr.bf16.mxu0 0
        %396 = vmatpush1.bf16.msra.mxu0 0
        %397 = vmatprep.subr.bf16.mxu0 0
        %398 = vmatpush1.bf16.msra.mxu0 0
        %399 = vmatprep.subr.bf16.mxu0 0
        %400 = vmatpush1.bf16.msra.mxu0 0
        %401 = vmatprep.subr.bf16.mxu0 0
        %402 = vmatpush1.bf16.msra.mxu0 %v288
        %403 = vmatprep.subr.bf16.mxu0 0
        %404 = vmatpush2.bf16.msra.mxu0 0
        %405 = vmatprep.subr.bf16.mxu0 0
        %406 = vmatpush2.bf16.msra.mxu0 0
        %407 = vmatprep.subr.bf16.mxu0 0
        %408 = vmatpush2.bf16.msra.mxu0 0
        %409 = vmatprep.subr.bf16.mxu0 0
        %410 = vmatpush2.bf16.msra.mxu0 0
        %411 = vmatprep.subr.bf16.mxu0 0
        %412 = vmatpush2.bf16.msra.mxu0 0
        %413 = vmatprep.subr.bf16.mxu0 0
        %414 = vmatpush2.bf16.msra.mxu0 0
        %415 = vmatprep.subr.bf16.mxu0 0
        %416 = vmatpush2.bf16.msra.mxu0 0
        %417 = vmatprep.subr.bf16.mxu0 0
        %418 = vmatpush2.bf16.msra.mxu0 0
        %419 = vmatprep.mubr.bf16.mxu0 0
        %420 = vmatmul.mubr.bf16.gmra.mxu0 %v292
        %v421 = vpop.f32.mrf.mxu0
        %v422 = vadd.f32 %v283, %v421
        %v423 = vpop.f32.mrf.mxu0
        %v424 = vpop.f32.mrf.mxu0
        %v425 = vadd.f32 %v283, %v424
        %v426 = vpop.f32.mrf.mxu0
        %427 = vmatprep.mubr.bf16.mxu0 0
        %428 = vmatmul.mubr.bf16.gmra.mxu0 %v295
        %v429 = vpop.f32.mrf.mxu0
        %v430 = vadd.f32 %v283, %v429
        %v431 = vpop.f32.mrf.mxu0
        %v432 = vpop.f32.mrf.mxu0
        %v433 = vadd.f32 %v283, %v432
        %v434 = vpop.f32.mrf.mxu0
        %435 = vmatprep.mubr.bf16.mxu0 0
        %436 = vmatmul.mubr.bf16.gmra.mxu0 %v298
        %v437 = vpop.f32.mrf.mxu0
        %v438 = vadd.f32 %v283, %v437
        %v439 = vpop.f32.mrf.mxu0
        %v440 = vpop.f32.mrf.mxu0
        %v441 = vadd.f32 %v283, %v440
        %v442 = vpop.f32.mrf.mxu0
        %443 = vmatprep.mubr.bf16.mxu0 0
        %444 = vmatmul.mubr.bf16.gmra.mxu0 %v301
        %v445 = vpop.f32.mrf.mxu0
        %v446 = vadd.f32 %v283, %v445
        %v447 = vpop.f32.mrf.mxu0
        %v448 = vpop.f32.mrf.mxu0
        %v449 = vadd.f32 %v283, %v448
        %v450 = vpop.f32.mrf.mxu0
        %451 = vmatprep.mubr.bf16.mxu0 0
        %452 = vmatmul.mubr.bf16.gmra.mxu0 %v304
        %v453 = vpop.f32.mrf.mxu0
        %v454 = vadd.f32 %v283, %v453
        %v455 = vpop.f32.mrf.mxu0
        %v456 = vpop.f32.mrf.mxu0
        %v457 = vadd.f32 %v283, %v456
        %v458 = vpop.f32.mrf.mxu0
        %459 = vmatprep.mubr.bf16.mxu0 0
        %460 = vmatmul.mubr.bf16.gmra.mxu0 %v307
        %v461 = vpop.f32.mrf.mxu0
        %v462 = vadd.f32 %v283, %v461
        %v463 = vpop.f32.mrf.mxu0
        %v464 = vpop.f32.mrf.mxu0
        %v465 = vadd.f32 %v283, %v464
        %v466 = vpop.f32.mrf.mxu0
        %467 = vmatprep.mubr.bf16.mxu0 0
        %468 = vmatmul.mubr.bf16.gmra.mxu0 %v310
        %v469 = vpop.f32.mrf.mxu0
        %v470 = vadd.f32 %v283, %v469
        %v471 = vpop.f32.mrf.mxu0
        %v472 = vpop.f32.mrf.mxu0
        %v473 = vadd.f32 %v283, %v472
        %v474 = vpop.f32.mrf.mxu0
        %475 = vmatprep.mubr.bf16.mxu0 0
        %476 = vmatmul.mubr.bf16.gmra.mxu0 %v313
        %v477 = vpop.f32.mrf.mxu0
        %v478 = vadd.f32 %v283, %v477
        %v479 = vpop.f32.mrf.mxu0
        %v480 = vpop.f32.mrf.mxu0
        %v481 = vadd.f32 %v283, %v480
        %v482 = vpop.f32.mrf.mxu0
        %483 = vmatprep.mubr.bf16.mxu0 0
        %484 = vmatmul.mubr.bf16.gmra.mxu0 %v316
        %v485 = vpop.f32.mrf.mxu0
        %v486 = vadd.f32 %v283, %v485
        %v487 = vpop.f32.mrf.mxu0
        %v488 = vpop.f32.mrf.mxu0
        %v489 = vadd.f32 %v283, %v488
        %v490 = vpop.f32.mrf.mxu0
        %491 = vmatprep.mubr.bf16.mxu0 0
        %492 = vmatmul.mubr.bf16.gmra.mxu0 %v319
        %v493 = vpop.f32.mrf.mxu0
        %v494 = vadd.f32 %v283, %v493
        %v495 = vpop.f32.mrf.mxu0
        %v496 = vpop.f32.mrf.mxu0
        %v497 = vadd.f32 %v283, %v496
        %v498 = vpop.f32.mrf.mxu0
        %499 = vmatprep.mubr.bf16.mxu0 0
        %500 = vmatmul.mubr.bf16.gmra.mxu0 %v322
        %v501 = vpop.f32.mrf.mxu0
        %v502 = vadd.f32 %v283, %v501
        %v503 = vpop.f32.mrf.mxu0
        %v504 = vpop.f32.mrf.mxu0
        %v505 = vadd.f32 %v283, %v504
        %v506 = vpop.f32.mrf.mxu0
        %507 = vmatprep.mubr.bf16.mxu0 0
        %508 = vmatmul.mubr.bf16.gmra.mxu0 %v325
        %v509 = vpop.f32.mrf.mxu0
        %v510 = vadd.f32 %v283, %v509
        %v511 = vpop.f32.mrf.mxu0
        %v512 = vpop.f32.mrf.mxu0
        %v513 = vadd.f32 %v283, %v512
        %v514 = vpop.f32.mrf.mxu0
        %515 = vmatprep.mubr.bf16.mxu0 0
        %516 = vmatmul.mubr.bf16.gmra.mxu0 %v328
        %v517 = vpop.f32.mrf.mxu0
        %v518 = vadd.f32 %v283, %v517
        %v519 = vpop.f32.mrf.mxu0
        %v520 = vpop.f32.mrf.mxu0
        %v521 = vadd.f32 %v283, %v520
        %v522 = vpop.f32.mrf.mxu0
        %523 = vmatprep.mubr.bf16.mxu0 0
        %524 = vmatmul.mubr.bf16.gmra.mxu0 %v331
        %v525 = vpop.f32.mrf.mxu0
        %v526 = vadd.f32 %v283, %v525
        %v527 = vpop.f32.mrf.mxu0
        %v528 = vpop.f32.mrf.mxu0
        %v529 = vadd.f32 %v283, %v528
        %v530 = vpop.f32.mrf.mxu0
        %531 = vmatprep.mubr.bf16.mxu0 0
        %532 = vmatmul.mubr.bf16.gmra.mxu0 %v334
        %v533 = vpop.f32.mrf.mxu0
        %v534 = vadd.f32 %v283, %v533
        %v535 = vpop.f32.mrf.mxu0
        %v536 = vpop.f32.mrf.mxu0
        %v537 = vadd.f32 %v283, %v536
        %v538 = vpop.f32.mrf.mxu0
        %539 = vmatprep.mubr.bf16.mxu0 0
        %540 = vmatmul.mubr.bf16.gmra.mxu0 %v337
        %v541 = vpop.f32.mrf.mxu0
        %v542 = vadd.f32 %v283, %v541
        %v543 = vpop.f32.mrf.mxu0
        %v544 = vpop.f32.mrf.mxu0
        %v545 = vadd.f32 %v283, %v544
        %v546 = vpop.f32.mrf.mxu0
        %547 = vmatprep.mubr.bf16.mxu0 0
        %548 = vmatmul.mubr.bf16.gmra.mxu0 %v340
        %v549 = vpop.f32.mrf.mxu0
        %v550 = vadd.f32 %v283, %v549
        %v551 = vpop.f32.mrf.mxu0
        %v552 = vpop.f32.mrf.mxu0
        %v553 = vadd.f32 %v283, %v552
        %v554 = vpop.f32.mrf.mxu0
        %555 = vmatprep.mubr.bf16.mxu0 0
        %556 = vmatmul.mubr.bf16.gmra.mxu0 %v343
        %v557 = vpop.f32.mrf.mxu0
        %v558 = vadd.f32 %v283, %v557
        %v559 = vpop.f32.mrf.mxu0
        %v560 = vpop.f32.mrf.mxu0
        %v561 = vadd.f32 %v283, %v560
        %v562 = vpop.f32.mrf.mxu0
        %563 = vmatprep.mubr.bf16.mxu0 0
        %564 = vmatmul.mubr.bf16.gmra.mxu0 %v346
        %v565 = vpop.f32.mrf.mxu0
        %v566 = vadd.f32 %v283, %v565
        %v567 = vpop.f32.mrf.mxu0
        %v568 = vpop.f32.mrf.mxu0
        %v569 = vadd.f32 %v283, %v568
        %v570 = vpop.f32.mrf.mxu0
        %571 = vmatprep.mubr.bf16.mxu0 0
        %572 = vmatmul.mubr.bf16.gmra.mxu0 %v349
        %v573 = vpop.f32.mrf.mxu0
        %v574 = vadd.f32 %v283, %v573
        %v575 = vpop.f32.mrf.mxu0
        %v576 = vpop.f32.mrf.mxu0
        %v577 = vadd.f32 %v283, %v576
        %v578 = vpop.f32.mrf.mxu0
        %579 = vmatprep.mubr.bf16.mxu0 0
        %580 = vmatmul.mubr.bf16.gmra.mxu0 %v352
        %v581 = vpop.f32.mrf.mxu0
        %v582 = vadd.f32 %v283, %v581
        %v583 = vpop.f32.mrf.mxu0
        %v584 = vpop.f32.mrf.mxu0
        %v585 = vadd.f32 %v283, %v584
        %v586 = vpop.f32.mrf.mxu0
        %587 = vmatprep.mubr.bf16.mxu0 0
        %588 = vmatmul.mubr.bf16.gmra.mxu0 %v355
        %v589 = vpop.f32.mrf.mxu0
        %v590 = vadd.f32 %v283, %v589
        %v591 = vpop.f32.mrf.mxu0
        %v592 = vpop.f32.mrf.mxu0
        %v593 = vadd.f32 %v283, %v592
        %v594 = vpop.f32.mrf.mxu0
        %595 = vmatprep.mubr.bf16.mxu0 0
        %596 = vmatmul.mubr.bf16.gmra.mxu0 %v358
        %v597 = vpop.f32.mrf.mxu0
        %v598 = vadd.f32 %v283, %v597
        %v599 = vpop.f32.mrf.mxu0
        %v600 = vpop.f32.mrf.mxu0
        %v601 = vadd.f32 %v283, %v600
        %v602 = vpop.f32.mrf.mxu0
        %603 = vmatprep.mubr.bf16.mxu0 0
        %604 = vmatmul.mubr.bf16.gmra.mxu0 %v361
        %v605 = vpop.f32.mrf.mxu0
        %v606 = vadd.f32 %v283, %v605
        %v607 = vpop.f32.mrf.mxu0
        %v608 = vpop.f32.mrf.mxu0
        %v609 = vadd.f32 %v283, %v608
        %v610 = vpop.f32.mrf.mxu0
        %611 = vmatprep.mubr.bf16.mxu0 0
        %612 = vmatmul.mubr.bf16.gmra.mxu0 %v364
        %v613 = vpop.f32.mrf.mxu0
        %v614 = vadd.f32 %v283, %v613
        %v615 = vpop.f32.mrf.mxu0
        %v616 = vpop.f32.mrf.mxu0
        %v617 = vadd.f32 %v283, %v616
        %v618 = vpop.f32.mrf.mxu0
        %619 = vmatprep.mubr.bf16.mxu0 0
        %620 = vmatmul.mubr.bf16.gmra.mxu0 %v367
        %v621 = vpop.f32.mrf.mxu0
        %v622 = vadd.f32 %v283, %v621
        %v623 = vpop.f32.mrf.mxu0
        %v624 = vpop.f32.mrf.mxu0
        %v625 = vadd.f32 %v283, %v624
        %v626 = vpop.f32.mrf.mxu0
        %627 = vmatprep.mubr.bf16.mxu0 0
        %628 = vmatmul.mubr.bf16.gmra.mxu0 %v370
        %v629 = vpop.f32.mrf.mxu0
        %v630 = vadd.f32 %v283, %v629
        %v631 = vpop.f32.mrf.mxu0
        %v632 = vpop.f32.mrf.mxu0
        %v633 = vadd.f32 %v283, %v632
        %v634 = vpop.f32.mrf.mxu0
        %635 = vmatprep.mubr.bf16.mxu0 0
        %636 = vmatmul.mubr.bf16.gmra.mxu0 %v373
        %v637 = vpop.f32.mrf.mxu0
        %v638 = vadd.f32 %v283, %v637
        %v639 = vpop.f32.mrf.mxu0
        %v640 = vpop.f32.mrf.mxu0
        %v641 = vadd.f32 %v283, %v640
        %v642 = vpop.f32.mrf.mxu0
        %643 = vmatprep.mubr.bf16.mxu0 0
        %644 = vmatmul.mubr.bf16.gmra.mxu0 %v376
        %v645 = vpop.f32.mrf.mxu0
        %v646 = vadd.f32 %v283, %v645
        %v647 = vpop.f32.mrf.mxu0
        %v648 = vpop.f32.mrf.mxu0
        %v649 = vadd.f32 %v283, %v648
        %v650 = vpop.f32.mrf.mxu0
        %651 = vmatprep.mubr.bf16.mxu0 0
        %652 = vmatmul.mubr.bf16.gmra.mxu0 %v379
        %v653 = vpop.f32.mrf.mxu0
        %v654 = vadd.f32 %v283, %v653
        %v655 = vpop.f32.mrf.mxu0
        %v656 = vpop.f32.mrf.mxu0
        %v657 = vadd.f32 %v283, %v656
        %v658 = vpop.f32.mrf.mxu0
        %659 = vmatprep.mubr.bf16.mxu0 0
        %660 = vmatmul.mubr.bf16.gmra.mxu0 %v382
        %v661 = vpop.f32.mrf.mxu0
        %v662 = vadd.f32 %v283, %v661
        %v663 = vpop.f32.mrf.mxu0
        %v664 = vpop.f32.mrf.mxu0
        %v665 = vadd.f32 %v283, %v664
        %v666 = vpop.f32.mrf.mxu0
        %667 = vmatprep.mubr.bf16.mxu0 0
        %668 = vmatmul.mubr.bf16.gmra.mxu0 %v385
        %v669 = vpop.f32.mrf.mxu0
        %v670 = vadd.f32 %v283, %v669
        %v671 = vpop.f32.mrf.mxu0
        %v672 = vpop.f32.mrf.mxu0
        %v673 = vadd.f32 %v283, %v672
        %v674 = vpop.f32.mrf.mxu0
        %675 = vdwg.mxu0
        %v676 = vmax.f32 %v422, 0.0
        %v677 = vmax.f32 %v425, 0.0
        %v678 = vmax.f32 %v430, 0.0
        %v679 = vmax.f32 %v433, 0.0
        %v680 = vmax.f32 %v438, 0.0
        %v681 = vmax.f32 %v441, 0.0
        %v682 = vmax.f32 %v446, 0.0
        %v683 = vmax.f32 %v449, 0.0
        %v684 = vmax.f32 %v454, 0.0
        %v685 = vmax.f32 %v457, 0.0
        %v686 = vmax.f32 %v462, 0.0
        %v687 = vmax.f32 %v465, 0.0
        %v688 = vmax.f32 %v470, 0.0
        %v689 = vmax.f32 %v473, 0.0
        %v690 = vmax.f32 %v478, 0.0
        %v691 = vmax.f32 %v481, 0.0
        %v692 = vmax.f32 %v486, 0.0
        %v693 = vmax.f32 %v489, 0.0
        %v694 = vmax.f32 %v494, 0.0
        %v695 = vmax.f32 %v497, 0.0
        %v696 = vmax.f32 %v502, 0.0
        %v697 = vmax.f32 %v505, 0.0
        %v698 = vmax.f32 %v510, 0.0
        %v699 = vmax.f32 %v513, 0.0
        %v700 = vmax.f32 %v518, 0.0
        %v701 = vmax.f32 %v521, 0.0
        %v702 = vmax.f32 %v526, 0.0
        %v703 = vmax.f32 %v529, 0.0
        %v704 = vmax.f32 %v534, 0.0
        %v705 = vmax.f32 %v537, 0.0
        %v706 = vmax.f32 %v542, 0.0
        %v707 = vmax.f32 %v545, 0.0
        %v708 = vmax.f32 %v550, 0.0
        %v709 = vmax.f32 %v553, 0.0
        %v710 = vmax.f32 %v558, 0.0
        %v711 = vmax.f32 %v561, 0.0
        %v712 = vmax.f32 %v566, 0.0
        %v713 = vmax.f32 %v569, 0.0
        %v714 = vmax.f32 %v574, 0.0
        %v715 = vmax.f32 %v577, 0.0
        %v716 = vmax.f32 %v582, 0.0
        %v717 = vmax.f32 %v585, 0.0
        %v718 = vmax.f32 %v590, 0.0
        %v719 = vmax.f32 %v593, 0.0
        %v720 = vmax.f32 %v598, 0.0
        %v721 = vmax.f32 %v601, 0.0
        %v722 = vmax.f32 %v606, 0.0
        %v723 = vmax.f32 %v609, 0.0
        %v724 = vmax.f32 %v614, 0.0
        %v725 = vmax.f32 %v617, 0.0
        %v726 = vmax.f32 %v622, 0.0
        %v727 = vmax.f32 %v625, 0.0
        %v728 = vmax.f32 %v630, 0.0
        %v729 = vmax.f32 %v633, 0.0
        %v730 = vmax.f32 %v638, 0.0
        %v731 = vmax.f32 %v641, 0.0
        %v732 = vmax.f32 %v646, 0.0
        %v733 = vmax.f32 %v649, 0.0
        %v734 = vmax.f32 %v654, 0.0
        %v735 = vmax.f32 %v657, 0.0
        %v736 = vmax.f32 %v662, 0.0
        %v737 = vmax.f32 %v665, 0.0
        %v738 = vmax.f32 %v670, 0.0
        %v739 = vmax.f32 %v673, 0.0
        %v740 = vpack.c.bf16 %v677, %v676
        %v741 = vpack.c.bf16 %v679, %v678
        %v742 = vpack.c.bf16 %v681, %v680
        %v743 = vpack.c.bf16 %v683, %v682
        %v744 = vpack.c.bf16 %v685, %v684
        %v745 = vpack.c.bf16 %v687, %v686
        %v746 = vpack.c.bf16 %v689, %v688
        %v747 = vpack.c.bf16 %v691, %v690
        %v748 = vpack.c.bf16 %v693, %v692
        %v749 = vpack.c.bf16 %v695, %v694
        %v750 = vpack.c.bf16 %v697, %v696
        %v751 = vpack.c.bf16 %v699, %v698
        %v752 = vpack.c.bf16 %v701, %v700
        %v753 = vpack.c.bf16 %v703, %v702
        %v754 = vpack.c.bf16 %v705, %v704
        %v755 = vpack.c.bf16 %v707, %v706
        %v756 = vpack.c.bf16 %v709, %v708
        %v757 = vpack.c.bf16 %v711, %v710
        %v758 = vpack.c.bf16 %v713, %v712
        %v759 = vpack.c.bf16 %v715, %v714
        %v760 = vpack.c.bf16 %v717, %v716
        %v761 = vpack.c.bf16 %v719, %v718
        %v762 = vpack.c.bf16 %v721, %v720
        %v763 = vpack.c.bf16 %v723, %v722
        %v764 = vpack.c.bf16 %v725, %v724
        %v765 = vpack.c.bf16 %v727, %v726
        %v766 = vpack.c.bf16 %v729, %v728
        %v767 = vpack.c.bf16 %v731, %v730
        %v768 = vpack.c.bf16 %v733, %v732
        %v769 = vpack.c.bf16 %v735, %v734
        %v770 = vpack.c.bf16 %v737, %v736
        %v771 = vpack.c.bf16 %v739, %v738
        %v772 = vlaneseq
        %v773 = vshrl.u32 %v772, 7
        %v774 = vsub.s32 1, %v773
        %v775 = vrot.slane %v183, %v774
        %v780 = vunpack.c.l.b16 %v175
        %v781 = vunpack.c.l.b16 %v176
        %v782 = vunpack.c.l.b16 %v177
        %v783 = vunpack.c.l.b16 %v178
        %v784 = vpack.c.b16 %v781, %v780
        %v785 = vpack.c.b16 %v783, %v782
        %vm788 = vcmask 261120
        %v790 = vsel %vm788, %v740, 0
        %v793 = vsel %vm788, %v741, 0
        %v796 = vsel %vm788, %v742, 0
        %v799 = vsel %vm788, %v743, 0
        %v802 = vsel %vm788, %v744, 0
        %v805 = vsel %vm788, %v745, 0
        %v808 = vsel %vm788, %v746, 0
        %v811 = vsel %vm788, %v747, 0
        %v814 = vsel %vm788, %v748, 0
        %v817 = vsel %vm788, %v749, 0
        %v820 = vsel %vm788, %v750, 0
        %v823 = vsel %vm788, %v751, 0
        %v826 = vsel %vm788, %v752, 0
        %v829 = vsel %vm788, %v753, 0
        %v832 = vsel %vm788, %v754, 0
        %v835 = vsel %vm788, %v755, 0
        %v838 = vsel %vm788, %v756, 0
        %v841 = vsel %vm788, %v757, 0
        %v844 = vsel %vm788, %v758, 0
        %v847 = vsel %vm788, %v759, 0
        %v850 = vsel %vm788, %v760, 0
        %v853 = vsel %vm788, %v761, 0
        %v856 = vsel %vm788, %v762, 0
        %v859 = vsel %vm788, %v763, 0
        %v862 = vsel %vm788, %v764, 0
        %v865 = vsel %vm788, %v765, 0
        %v868 = vsel %vm788, %v766, 0
        %v871 = vsel %vm788, %v767, 0
        %v874 = vsel %vm788, %v768, 0
        %v877 = vsel %vm788, %v769, 0
        %v880 = vsel %vm788, %v770, 0
        %v883 = vsel %vm788, %v771, 0
        %885 = vmatprep.subr.bf16.mxu0 0
        %886 = vmatpush1.bf16.msra.mxu0 0
        %887 = vmatprep.subr.bf16.mxu0 0
        %888 = vmatpush1.bf16.msra.mxu0 0
        %889 = vmatprep.subr.bf16.mxu0 0
        %890 = vmatpush1.bf16.msra.mxu0 0
        %891 = vmatprep.subr.bf16.mxu0 0
        %892 = vmatpush1.bf16.msra.mxu0 0
        %893 = vmatprep.subr.bf16.mxu0 0
        %894 = vmatpush1.bf16.msra.mxu0 0
        %895 = vmatprep.subr.bf16.mxu0 0
        %896 = vmatpush1.bf16.msra.mxu0 0
        %897 = vmatprep.subr.bf16.mxu0 0
        %898 = vmatpush1.bf16.msra.mxu0 %v785
        %899 = vmatprep.subr.bf16.mxu0 0
        %900 = vmatpush1.bf16.msra.mxu0 %v784
        %901 = vmatprep.subr.bf16.mxu0 0
        %902 = vmatpush2.bf16.msra.mxu0 0
        %903 = vmatprep.subr.bf16.mxu0 0
        %904 = vmatpush2.bf16.msra.mxu0 0
        %905 = vmatprep.subr.bf16.mxu0 0
        %906 = vmatpush2.bf16.msra.mxu0 0
        %907 = vmatprep.subr.bf16.mxu0 0
        %908 = vmatpush2.bf16.msra.mxu0 0
        %909 = vmatprep.subr.bf16.mxu0 0
        %910 = vmatpush2.bf16.msra.mxu0 0
        %911 = vmatprep.subr.bf16.mxu0 0
        %912 = vmatpush2.bf16.msra.mxu0 0
        %913 = vmatprep.subr.bf16.mxu0 0
        %914 = vmatpush2.bf16.msra.mxu0 0
        %915 = vmatprep.subr.bf16.mxu0 0
        %916 = vmatpush2.bf16.msra.mxu0 0
        %917 = vmatprep.mubr.bf16.mxu0 0
        %918 = vmatmul.mubr.bf16.gmra.mxu0 %v790
        %v919 = vpop.f32.mrf.mxu0
        %v920 = vadd.f32 %v775, %v919
        %v921 = vpop.f32.mrf.mxu0
        %v922 = vpop.f32.mrf.mxu0
        %v923 = vadd.f32 %v775, %v922
        %v924 = vpop.f32.mrf.mxu0
        %925 = vmatprep.mubr.bf16.mxu0 0
        %926 = vmatmul.mubr.bf16.gmra.mxu0 %v793
        %v927 = vpop.f32.mrf.mxu0
        %v928 = vadd.f32 %v775, %v927
        %v929 = vpop.f32.mrf.mxu0
        %v930 = vpop.f32.mrf.mxu0
        %v931 = vadd.f32 %v775, %v930
        %v932 = vpop.f32.mrf.mxu0
        %933 = vmatprep.mubr.bf16.mxu0 0
        %934 = vmatmul.mubr.bf16.gmra.mxu0 %v796
        %v935 = vpop.f32.mrf.mxu0
        %v936 = vadd.f32 %v775, %v935
        %v937 = vpop.f32.mrf.mxu0
        %v938 = vpop.f32.mrf.mxu0
        %v939 = vadd.f32 %v775, %v938
        %v940 = vpop.f32.mrf.mxu0
        %941 = vmatprep.mubr.bf16.mxu0 0
        %942 = vmatmul.mubr.bf16.gmra.mxu0 %v799
        %v943 = vpop.f32.mrf.mxu0
        %v944 = vadd.f32 %v775, %v943
        %v945 = vpop.f32.mrf.mxu0
        %v946 = vpop.f32.mrf.mxu0
        %v947 = vadd.f32 %v775, %v946
        %v948 = vpop.f32.mrf.mxu0
        %949 = vmatprep.mubr.bf16.mxu0 0
        %950 = vmatmul.mubr.bf16.gmra.mxu0 %v802
        %v951 = vpop.f32.mrf.mxu0
        %v952 = vadd.f32 %v775, %v951
        %v953 = vpop.f32.mrf.mxu0
        %v954 = vpop.f32.mrf.mxu0
        %v955 = vadd.f32 %v775, %v954
        %v956 = vpop.f32.mrf.mxu0
        %957 = vmatprep.mubr.bf16.mxu0 0
        %958 = vmatmul.mubr.bf16.gmra.mxu0 %v805
        %v959 = vpop.f32.mrf.mxu0
        %v960 = vadd.f32 %v775, %v959
        %v961 = vpop.f32.mrf.mxu0
        %v962 = vpop.f32.mrf.mxu0
        %v963 = vadd.f32 %v775, %v962
        %v964 = vpop.f32.mrf.mxu0
        %965 = vmatprep.mubr.bf16.mxu0 0
        %966 = vmatmul.mubr.bf16.gmra.mxu0 %v808
        %v967 = vpop.f32.mrf.mxu0
        %v968 = vadd.f32 %v775, %v967
        %v969 = vpop.f32.mrf.mxu0
        %v970 = vpop.f32.mrf.mxu0
        %v971 = vadd.f32 %v775, %v970
        %v972 = vpop.f32.mrf.mxu0
        %973 = vmatprep.mubr.bf16.mxu0 0
        %974 = vmatmul.mubr.bf16.gmra.mxu0 %v811
        %v975 = vpop.f32.mrf.mxu0
        %v976 = vadd.f32 %v775, %v975
        %v977 = vpop.f32.mrf.mxu0
        %v978 = vpop.f32.mrf.mxu0
        %v979 = vadd.f32 %v775, %v978
        %v980 = vpop.f32.mrf.mxu0
        %981 = vmatprep.mubr.bf16.mxu0 0
        %982 = vmatmul.mubr.bf16.gmra.mxu0 %v814
        %v983 = vpop.f32.mrf.mxu0
        %v984 = vadd.f32 %v775, %v983
        %v985 = vpop.f32.mrf.mxu0
        %v986 = vpop.f32.mrf.mxu0
        %v987 = vadd.f32 %v775, %v986
        %v988 = vpop.f32.mrf.mxu0
        %989 = vmatprep.mubr.bf16.mxu0 0
        %990 = vmatmul.mubr.bf16.gmra.mxu0 %v817
        %v991 = vpop.f32.mrf.mxu0
        %v992 = vadd.f32 %v775, %v991
        %v993 = vpop.f32.mrf.mxu0
        %v994 = vpop.f32.mrf.mxu0
        %v995 = vadd.f32 %v775, %v994
        %v996 = vpop.f32.mrf.mxu0
        %997 = vmatprep.mubr.bf16.mxu0 0
        %998 = vmatmul.mubr.bf16.gmra.mxu0 %v820
        %v999 = vpop.f32.mrf.mxu0
        %v1000 = vadd.f32 %v775, %v999
        %v1001 = vpop.f32.mrf.mxu0
        %v1002 = vpop.f32.mrf.mxu0
        %v1003 = vadd.f32 %v775, %v1002
        %v1004 = vpop.f32.mrf.mxu0
        %1005 = vmatprep.mubr.bf16.mxu0 0
        %1006 = vmatmul.mubr.bf16.gmra.mxu0 %v823
        %v1007 = vpop.f32.mrf.mxu0
        %v1008 = vadd.f32 %v775, %v1007
        %v1009 = vpop.f32.mrf.mxu0
        %v1010 = vpop.f32.mrf.mxu0
        %v1011 = vadd.f32 %v775, %v1010
        %v1012 = vpop.f32.mrf.mxu0
        %1013 = vmatprep.mubr.bf16.mxu0 0
        %1014 = vmatmul.mubr.bf16.gmra.mxu0 %v826
        %v1015 = vpop.f32.mrf.mxu0
        %v1016 = vadd.f32 %v775, %v1015
        %v1017 = vpop.f32.mrf.mxu0
        %v1018 = vpop.f32.mrf.mxu0
        %v1019 = vadd.f32 %v775, %v1018
        %v1020 = vpop.f32.mrf.mxu0
        %1021 = vmatprep.mubr.bf16.mxu0 0
        %1022 = vmatmul.mubr.bf16.gmra.mxu0 %v829
        %v1023 = vpop.f32.mrf.mxu0
        %v1024 = vadd.f32 %v775, %v1023
        %v1025 = vpop.f32.mrf.mxu0
        %v1026 = vpop.f32.mrf.mxu0
        %v1027 = vadd.f32 %v775, %v1026
        %v1028 = vpop.f32.mrf.mxu0
        %1029 = vmatprep.mubr.bf16.mxu0 0
        %1030 = vmatmul.mubr.bf16.gmra.mxu0 %v832
        %v1031 = vpop.f32.mrf.mxu0
        %v1032 = vadd.f32 %v775, %v1031
        %v1033 = vpop.f32.mrf.mxu0
        %v1034 = vpop.f32.mrf.mxu0
        %v1035 = vadd.f32 %v775, %v1034
        %v1036 = vpop.f32.mrf.mxu0
        %1037 = vmatprep.mubr.bf16.mxu0 0
        %1038 = vmatmul.mubr.bf16.gmra.mxu0 %v835
        %v1039 = vpop.f32.mrf.mxu0
        %v1040 = vadd.f32 %v775, %v1039
        %v1041 = vpop.f32.mrf.mxu0
        %v1042 = vpop.f32.mrf.mxu0
        %v1043 = vadd.f32 %v775, %v1042
        %v1044 = vpop.f32.mrf.mxu0
        %1045 = vmatprep.mubr.bf16.mxu0 0
        %1046 = vmatmul.mubr.bf16.gmra.mxu0 %v838
        %v1047 = vpop.f32.mrf.mxu0
        %v1048 = vadd.f32 %v775, %v1047
        %v1049 = vpop.f32.mrf.mxu0
        %v1050 = vpop.f32.mrf.mxu0
        %v1051 = vadd.f32 %v775, %v1050
        %v1052 = vpop.f32.mrf.mxu0
        %1053 = vmatprep.mubr.bf16.mxu0 0
        %1054 = vmatmul.mubr.bf16.gmra.mxu0 %v841
        %v1055 = vpop.f32.mrf.mxu0
        %v1056 = vadd.f32 %v775, %v1055
        %v1057 = vpop.f32.mrf.mxu0
        %v1058 = vpop.f32.mrf.mxu0
        %v1059 = vadd.f32 %v775, %v1058
        %v1060 = vpop.f32.mrf.mxu0
        %1061 = vmatprep.mubr.bf16.mxu0 0
        %1062 = vmatmul.mubr.bf16.gmra.mxu0 %v844
        %v1063 = vpop.f32.mrf.mxu0
        %v1064 = vadd.f32 %v775, %v1063
        %v1065 = vpop.f32.mrf.mxu0
        %v1066 = vpop.f32.mrf.mxu0
        %v1067 = vadd.f32 %v775, %v1066
        %v1068 = vpop.f32.mrf.mxu0
        %1069 = vmatprep.mubr.bf16.mxu0 0
        %1070 = vmatmul.mubr.bf16.gmra.mxu0 %v847
        %v1071 = vpop.f32.mrf.mxu0
        %v1072 = vadd.f32 %v775, %v1071
        %v1073 = vpop.f32.mrf.mxu0
        %v1074 = vpop.f32.mrf.mxu0
        %v1075 = vadd.f32 %v775, %v1074
        %v1076 = vpop.f32.mrf.mxu0
        %1077 = vmatprep.mubr.bf16.mxu0 0
        %1078 = vmatmul.mubr.bf16.gmra.mxu0 %v850
        %v1079 = vpop.f32.mrf.mxu0
        %v1080 = vadd.f32 %v775, %v1079
        %v1081 = vpop.f32.mrf.mxu0
        %v1082 = vpop.f32.mrf.mxu0
        %v1083 = vadd.f32 %v775, %v1082
        %v1084 = vpop.f32.mrf.mxu0
        %1085 = vmatprep.mubr.bf16.mxu0 0
        %1086 = vmatmul.mubr.bf16.gmra.mxu0 %v853
        %v1087 = vpop.f32.mrf.mxu0
        %v1088 = vadd.f32 %v775, %v1087
        %v1089 = vpop.f32.mrf.mxu0
        %v1090 = vpop.f32.mrf.mxu0
        %v1091 = vadd.f32 %v775, %v1090
        %v1092 = vpop.f32.mrf.mxu0
        %1093 = vmatprep.mubr.bf16.mxu0 0
        %1094 = vmatmul.mubr.bf16.gmra.mxu0 %v856
        %v1095 = vpop.f32.mrf.mxu0
        %v1096 = vadd.f32 %v775, %v1095
        %v1097 = vpop.f32.mrf.mxu0
        %v1098 = vpop.f32.mrf.mxu0
        %v1099 = vadd.f32 %v775, %v1098
        %v1100 = vpop.f32.mrf.mxu0
        %1101 = vmatprep.mubr.bf16.mxu0 0
        %1102 = vmatmul.mubr.bf16.gmra.mxu0 %v859
        %v1103 = vpop.f32.mrf.mxu0
        %v1104 = vadd.f32 %v775, %v1103
        %v1105 = vpop.f32.mrf.mxu0
        %v1106 = vpop.f32.mrf.mxu0
        %v1107 = vadd.f32 %v775, %v1106
        %v1108 = vpop.f32.mrf.mxu0
        %1109 = vmatprep.mubr.bf16.mxu0 0
        %1110 = vmatmul.mubr.bf16.gmra.mxu0 %v862
        %v1111 = vpop.f32.mrf.mxu0
        %v1112 = vadd.f32 %v775, %v1111
        %v1113 = vpop.f32.mrf.mxu0
        %v1114 = vpop.f32.mrf.mxu0
        %v1115 = vadd.f32 %v775, %v1114
        %v1116 = vpop.f32.mrf.mxu0
        %1117 = vmatprep.mubr.bf16.mxu0 0
        %1118 = vmatmul.mubr.bf16.gmra.mxu0 %v865
        %v1119 = vpop.f32.mrf.mxu0
        %v1120 = vadd.f32 %v775, %v1119
        %v1121 = vpop.f32.mrf.mxu0
        %v1122 = vpop.f32.mrf.mxu0
        %v1123 = vadd.f32 %v775, %v1122
        %v1124 = vpop.f32.mrf.mxu0
        %1125 = vmatprep.mubr.bf16.mxu0 0
        %1126 = vmatmul.mubr.bf16.gmra.mxu0 %v868
        %v1127 = vpop.f32.mrf.mxu0
        %v1128 = vadd.f32 %v775, %v1127
        %v1129 = vpop.f32.mrf.mxu0
        %v1130 = vpop.f32.mrf.mxu0
        %v1131 = vadd.f32 %v775, %v1130
        %v1132 = vpop.f32.mrf.mxu0
        %1133 = vmatprep.mubr.bf16.mxu0 0
        %1134 = vmatmul.mubr.bf16.gmra.mxu0 %v871
        %v1135 = vpop.f32.mrf.mxu0
        %v1136 = vadd.f32 %v775, %v1135
        %v1137 = vpop.f32.mrf.mxu0
        %v1138 = vpop.f32.mrf.mxu0
        %v1139 = vadd.f32 %v775, %v1138
        %v1140 = vpop.f32.mrf.mxu0
        %1141 = vmatprep.mubr.bf16.mxu0 0
        %1142 = vmatmul.mubr.bf16.gmra.mxu0 %v874
        %v1143 = vpop.f32.mrf.mxu0
        %v1144 = vadd.f32 %v775, %v1143
        %v1145 = vpop.f32.mrf.mxu0
        %v1146 = vpop.f32.mrf.mxu0
        %v1147 = vadd.f32 %v775, %v1146
        %v1148 = vpop.f32.mrf.mxu0
        %1149 = vmatprep.mubr.bf16.mxu0 0
        %1150 = vmatmul.mubr.bf16.gmra.mxu0 %v877
        %v1151 = vpop.f32.mrf.mxu0
        %v1152 = vadd.f32 %v775, %v1151
        %v1153 = vpop.f32.mrf.mxu0
        %v1154 = vpop.f32.mrf.mxu0
        %v1155 = vadd.f32 %v775, %v1154
        %v1156 = vpop.f32.mrf.mxu0
        %1157 = vmatprep.mubr.bf16.mxu0 0
        %1158 = vmatmul.mubr.bf16.gmra.mxu0 %v880
        %v1159 = vpop.f32.mrf.mxu0
        %v1160 = vadd.f32 %v775, %v1159
        %v1161 = vpop.f32.mrf.mxu0
        %v1162 = vpop.f32.mrf.mxu0
        %v1163 = vadd.f32 %v775, %v1162
        %v1164 = vpop.f32.mrf.mxu0
        %1165 = vmatprep.mubr.bf16.mxu0 0
        %1166 = vmatmul.mubr.bf16.gmra.mxu0 %v883
        %v1167 = vpop.f32.mrf.mxu0
        %v1168 = vadd.f32 %v775, %v1167
        %v1169 = vpop.f32.mrf.mxu0
        %v1170 = vpop.f32.mrf.mxu0
        %v1171 = vadd.f32 %v775, %v1170
        %v1172 = vpop.f32.mrf.mxu0
        %1173 = vdwg.mxu0
        %v1174 = vmax.f32 %v920, 0.0
        %v1175 = vmax.f32 %v923, 0.0
        %v1176 = vmax.f32 %v928, 0.0
        %v1177 = vmax.f32 %v931, 0.0
        %v1178 = vmax.f32 %v936, 0.0
        %v1179 = vmax.f32 %v939, 0.0
        %v1180 = vmax.f32 %v944, 0.0
        %v1181 = vmax.f32 %v947, 0.0
        %v1182 = vmax.f32 %v952, 0.0
        %v1183 = vmax.f32 %v955, 0.0
        %v1184 = vmax.f32 %v960, 0.0
        %v1185 = vmax.f32 %v963, 0.0
        %v1186 = vmax.f32 %v968, 0.0
        %v1187 = vmax.f32 %v971, 0.0
        %v1188 = vmax.f32 %v976, 0.0
        %v1189 = vmax.f32 %v979, 0.0
        %v1190 = vmax.f32 %v984, 0.0
        %v1191 = vmax.f32 %v987, 0.0
        %v1192 = vmax.f32 %v992, 0.0
        %v1193 = vmax.f32 %v995, 0.0
        %v1194 = vmax.f32 %v1000, 0.0
        %v1195 = vmax.f32 %v1003, 0.0
        %v1196 = vmax.f32 %v1008, 0.0
        %v1197 = vmax.f32 %v1011, 0.0
        %v1198 = vmax.f32 %v1016, 0.0
        %v1199 = vmax.f32 %v1019, 0.0
        %v1200 = vmax.f32 %v1024, 0.0
        %v1201 = vmax.f32 %v1027, 0.0
        %v1202 = vmax.f32 %v1032, 0.0
        %v1203 = vmax.f32 %v1035, 0.0
        %v1204 = vmax.f32 %v1040, 0.0
        %v1205 = vmax.f32 %v1043, 0.0
        %v1206 = vmax.f32 %v1048, 0.0
        %v1207 = vmax.f32 %v1051, 0.0
        %v1208 = vmax.f32 %v1056, 0.0
        %v1209 = vmax.f32 %v1059, 0.0
        %v1210 = vmax.f32 %v1064, 0.0
        %v1211 = vmax.f32 %v1067, 0.0
        %v1212 = vmax.f32 %v1072, 0.0
        %v1213 = vmax.f32 %v1075, 0.0
        %v1214 = vmax.f32 %v1080, 0.0
        %v1215 = vmax.f32 %v1083, 0.0
        %v1216 = vmax.f32 %v1088, 0.0
        %v1217 = vmax.f32 %v1091, 0.0
        %v1218 = vmax.f32 %v1096, 0.0
        %v1219 = vmax.f32 %v1099, 0.0
        %v1220 = vmax.f32 %v1104, 0.0
        %v1221 = vmax.f32 %v1107, 0.0
        %v1222 = vmax.f32 %v1112, 0.0
        %v1223 = vmax.f32 %v1115, 0.0
        %v1224 = vmax.f32 %v1120, 0.0
        %v1225 = vmax.f32 %v1123, 0.0
        %v1226 = vmax.f32 %v1128, 0.0
        %v1227 = vmax.f32 %v1131, 0.0
        %v1228 = vmax.f32 %v1136, 0.0
        %v1229 = vmax.f32 %v1139, 0.0
        %v1230 = vmax.f32 %v1144, 0.0
        %v1231 = vmax.f32 %v1147, 0.0
        %v1232 = vmax.f32 %v1152, 0.0
        %v1233 = vmax.f32 %v1155, 0.0
        %v1234 = vmax.f32 %v1160, 0.0
        %v1235 = vmax.f32 %v1163, 0.0
        %v1236 = vmax.f32 %v1168, 0.0
        %v1237 = vmax.f32 %v1171, 0.0
        %v1238 = vpack.c.bf16 %v1175, %v1174
        %v1239 = vpack.c.bf16 %v1177, %v1176
        %v1240 = vpack.c.bf16 %v1179, %v1178
        %v1241 = vpack.c.bf16 %v1181, %v1180
        %v1242 = vpack.c.bf16 %v1183, %v1182
        %v1243 = vpack.c.bf16 %v1185, %v1184
        %v1244 = vpack.c.bf16 %v1187, %v1186
        %v1245 = vpack.c.bf16 %v1189, %v1188
        %v1246 = vpack.c.bf16 %v1191, %v1190
        %v1247 = vpack.c.bf16 %v1193, %v1192
        %v1248 = vpack.c.bf16 %v1195, %v1194
        %v1249 = vpack.c.bf16 %v1197, %v1196
        %v1250 = vpack.c.bf16 %v1199, %v1198
        %v1251 = vpack.c.bf16 %v1201, %v1200
        %v1252 = vpack.c.bf16 %v1203, %v1202
        %v1253 = vpack.c.bf16 %v1205, %v1204
        %v1254 = vpack.c.bf16 %v1207, %v1206
        %v1255 = vpack.c.bf16 %v1209, %v1208
        %v1256 = vpack.c.bf16 %v1211, %v1210
        %v1257 = vpack.c.bf16 %v1213, %v1212
        %v1258 = vpack.c.bf16 %v1215, %v1214
        %v1259 = vpack.c.bf16 %v1217, %v1216
        %v1260 = vpack.c.bf16 %v1219, %v1218
        %v1261 = vpack.c.bf16 %v1221, %v1220
        %v1262 = vpack.c.bf16 %v1223, %v1222
        %v1263 = vpack.c.bf16 %v1225, %v1224
        %v1264 = vpack.c.bf16 %v1227, %v1226
        %v1265 = vpack.c.bf16 %v1229, %v1228
        %v1266 = vpack.c.bf16 %v1231, %v1230
        %v1267 = vpack.c.bf16 %v1233, %v1232
        %v1268 = vpack.c.bf16 %v1235, %v1234
        %v1269 = vpack.c.bf16 %v1237, %v1236
        %v1270 = vlaneseq
        %v1271 = vshrl.u32 %v1270, 7
        %v1272 = vsub.s32 2, %v1271
        %v1273 = vrot.slane %v183, %v1272
        %v1278 = vunpack.c.l.b16 %v179
        %v1279 = vunpack.c.l.b16 %v180
        %v1280 = vunpack.c.l.b16 %v181
        %v1281 = vunpack.c.l.b16 %v182
        %v1282 = vpack.c.b16 %v1279, %v1278
        %v1283 = vpack.c.b16 %v1281, %v1280
        %v1287 = vsel %vm788, %v1238, 0
        %v1290 = vsel %vm788, %v1239, 0
        %v1293 = vsel %vm788, %v1240, 0
        %v1296 = vsel %vm788, %v1241, 0
        %v1299 = vsel %vm788, %v1242, 0
        %v1302 = vsel %vm788, %v1243, 0
        %v1305 = vsel %vm788, %v1244, 0
        %v1308 = vsel %vm788, %v1245, 0
        %v1311 = vsel %vm788, %v1246, 0
        %v1314 = vsel %vm788, %v1247, 0
        %v1317 = vsel %vm788, %v1248, 0
        %v1320 = vsel %vm788, %v1249, 0
        %v1323 = vsel %vm788, %v1250, 0
        %v1326 = vsel %vm788, %v1251, 0
        %v1329 = vsel %vm788, %v1252, 0
        %v1332 = vsel %vm788, %v1253, 0
        %v1335 = vsel %vm788, %v1254, 0
        %v1338 = vsel %vm788, %v1255, 0
        %v1341 = vsel %vm788, %v1256, 0
        %v1344 = vsel %vm788, %v1257, 0
        %v1347 = vsel %vm788, %v1258, 0
        %v1350 = vsel %vm788, %v1259, 0
        %v1353 = vsel %vm788, %v1260, 0
        %v1356 = vsel %vm788, %v1261, 0
        %v1359 = vsel %vm788, %v1262, 0
        %v1362 = vsel %vm788, %v1263, 0
        %v1365 = vsel %vm788, %v1264, 0
        %v1368 = vsel %vm788, %v1265, 0
        %v1371 = vsel %vm788, %v1266, 0
        %v1374 = vsel %vm788, %v1267, 0
        %v1377 = vsel %vm788, %v1268, 0
        %v1380 = vsel %vm788, %v1269, 0
        %1382 = vmatprep.subr.bf16.mxu0 0
        %1383 = vmatpush1.bf16.msra.mxu0 0
        %1384 = vmatprep.subr.bf16.mxu0 0
        %1385 = vmatpush1.bf16.msra.mxu0 0
        %1386 = vmatprep.subr.bf16.mxu0 0
        %1387 = vmatpush1.bf16.msra.mxu0 0
        %1388 = vmatprep.subr.bf16.mxu0 0
        %1389 = vmatpush1.bf16.msra.mxu0 0
        %1390 = vmatprep.subr.bf16.mxu0 0
        %1391 = vmatpush1.bf16.msra.mxu0 0
        %1392 = vmatprep.subr.bf16.mxu0 0
        %1393 = vmatpush1.bf16.msra.mxu0 0
        %1394 = vmatprep.subr.bf16.mxu0 0
        %1395 = vmatpush1.bf16.msra.mxu0 %v1283
        %1396 = vmatprep.subr.bf16.mxu0 0
        %1397 = vmatpush1.bf16.msra.mxu0 %v1282
        %1398 = vmatprep.subr.bf16.mxu0 0
        %1399 = vmatpush2.bf16.msra.mxu0 0
        %1400 = vmatprep.subr.bf16.mxu0 0
        %1401 = vmatpush2.bf16.msra.mxu0 0
        %1402 = vmatprep.subr.bf16.mxu0 0
        %1403 = vmatpush2.bf16.msra.mxu0 0
        %1404 = vmatprep.subr.bf16.mxu0 0
        %1405 = vmatpush2.bf16.msra.mxu0 0
        %1406 = vmatprep.subr.bf16.mxu0 0
        %1407 = vmatpush2.bf16.msra.mxu0 0
        %1408 = vmatprep.subr.bf16.mxu0 0
        %1409 = vmatpush2.bf16.msra.mxu0 0
        %1410 = vmatprep.subr.bf16.mxu0 0
        %1411 = vmatpush2.bf16.msra.mxu0 0
        %1412 = vmatprep.subr.bf16.mxu0 0
        %1413 = vmatpush2.bf16.msra.mxu0 0
        %1414 = vmatprep.mubr.bf16.mxu0 0
        %1415 = vmatmul.mubr.bf16.gmra.mxu0 %v1287
        %v1416 = vpop.f32.mrf.mxu0
        %v1417 = vadd.f32 %v1273, %v1416
        %v1418 = vpop.f32.mrf.mxu0
        %v1419 = vpop.f32.mrf.mxu0
        %v1420 = vadd.f32 %v1273, %v1419
        %v1421 = vpop.f32.mrf.mxu0
        %1422 = vmatprep.mubr.bf16.mxu0 0
        %1423 = vmatmul.mubr.bf16.gmra.mxu0 %v1290
        %v1424 = vpop.f32.mrf.mxu0
        %v1425 = vadd.f32 %v1273, %v1424
        %v1426 = vpop.f32.mrf.mxu0
        %v1427 = vpop.f32.mrf.mxu0
        %v1428 = vadd.f32 %v1273, %v1427
        %v1429 = vpop.f32.mrf.mxu0
        %1430 = vmatprep.mubr.bf16.mxu0 0
        %1431 = vmatmul.mubr.bf16.gmra.mxu0 %v1293
        %v1432 = vpop.f32.mrf.mxu0
        %v1433 = vadd.f32 %v1273, %v1432
        %v1434 = vpop.f32.mrf.mxu0
        %v1435 = vpop.f32.mrf.mxu0
        %v1436 = vadd.f32 %v1273, %v1435
        %v1437 = vpop.f32.mrf.mxu0
        %1438 = vmatprep.mubr.bf16.mxu0 0
        %1439 = vmatmul.mubr.bf16.gmra.mxu0 %v1296
        %v1440 = vpop.f32.mrf.mxu0
        %v1441 = vadd.f32 %v1273, %v1440
        %v1442 = vpop.f32.mrf.mxu0
        %v1443 = vpop.f32.mrf.mxu0
        %v1444 = vadd.f32 %v1273, %v1443
        %v1445 = vpop.f32.mrf.mxu0
        %1446 = vmatprep.mubr.bf16.mxu0 0
        %1447 = vmatmul.mubr.bf16.gmra.mxu0 %v1299
        %v1448 = vpop.f32.mrf.mxu0
        %v1449 = vadd.f32 %v1273, %v1448
        %v1450 = vpop.f32.mrf.mxu0
        %v1451 = vpop.f32.mrf.mxu0
        %v1452 = vadd.f32 %v1273, %v1451
        %v1453 = vpop.f32.mrf.mxu0
        %1454 = vmatprep.mubr.bf16.mxu0 0
        %1455 = vmatmul.mubr.bf16.gmra.mxu0 %v1302
        %v1456 = vpop.f32.mrf.mxu0
        %v1457 = vadd.f32 %v1273, %v1456
        %v1458 = vpop.f32.mrf.mxu0
        %v1459 = vpop.f32.mrf.mxu0
        %v1460 = vadd.f32 %v1273, %v1459
        %v1461 = vpop.f32.mrf.mxu0
        %1462 = vmatprep.mubr.bf16.mxu0 0
        %1463 = vmatmul.mubr.bf16.gmra.mxu0 %v1305
        %v1464 = vpop.f32.mrf.mxu0
        %v1465 = vadd.f32 %v1273, %v1464
        %v1466 = vpop.f32.mrf.mxu0
        %v1467 = vpop.f32.mrf.mxu0
        %v1468 = vadd.f32 %v1273, %v1467
        %v1469 = vpop.f32.mrf.mxu0
        %1470 = vmatprep.mubr.bf16.mxu0 0
        %1471 = vmatmul.mubr.bf16.gmra.mxu0 %v1308
        %v1472 = vpop.f32.mrf.mxu0
        %v1473 = vadd.f32 %v1273, %v1472
        %v1474 = vpop.f32.mrf.mxu0
        %v1475 = vpop.f32.mrf.mxu0
        %v1476 = vadd.f32 %v1273, %v1475
        %v1477 = vpop.f32.mrf.mxu0
        %1478 = vmatprep.mubr.bf16.mxu0 0
        %1479 = vmatmul.mubr.bf16.gmra.mxu0 %v1311
        %v1480 = vpop.f32.mrf.mxu0
        %v1481 = vadd.f32 %v1273, %v1480
        %v1482 = vpop.f32.mrf.mxu0
        %v1483 = vpop.f32.mrf.mxu0
        %v1484 = vadd.f32 %v1273, %v1483
        %v1485 = vpop.f32.mrf.mxu0
        %1486 = vmatprep.mubr.bf16.mxu0 0
        %1487 = vmatmul.mubr.bf16.gmra.mxu0 %v1314
        %v1488 = vpop.f32.mrf.mxu0
        %v1489 = vadd.f32 %v1273, %v1488
        %v1490 = vpop.f32.mrf.mxu0
        %v1491 = vpop.f32.mrf.mxu0
        %v1492 = vadd.f32 %v1273, %v1491
        %v1493 = vpop.f32.mrf.mxu0
        %1494 = vmatprep.mubr.bf16.mxu0 0
        %1495 = vmatmul.mubr.bf16.gmra.mxu0 %v1317
        %v1496 = vpop.f32.mrf.mxu0
        %v1497 = vadd.f32 %v1273, %v1496
        %v1498 = vpop.f32.mrf.mxu0
        %v1499 = vpop.f32.mrf.mxu0
        %v1500 = vadd.f32 %v1273, %v1499
        %v1501 = vpop.f32.mrf.mxu0
        %1502 = vmatprep.mubr.bf16.mxu0 0
        %1503 = vmatmul.mubr.bf16.gmra.mxu0 %v1320
        %v1504 = vpop.f32.mrf.mxu0
        %v1505 = vadd.f32 %v1273, %v1504
        %v1506 = vpop.f32.mrf.mxu0
        %v1507 = vpop.f32.mrf.mxu0
        %v1508 = vadd.f32 %v1273, %v1507
        %v1509 = vpop.f32.mrf.mxu0
        %1510 = vmatprep.mubr.bf16.mxu0 0
        %1511 = vmatmul.mubr.bf16.gmra.mxu0 %v1323
        %v1512 = vpop.f32.mrf.mxu0
        %v1513 = vadd.f32 %v1273, %v1512
        %v1514 = vpop.f32.mrf.mxu0
        %v1515 = vpop.f32.mrf.mxu0
        %v1516 = vadd.f32 %v1273, %v1515
        %v1517 = vpop.f32.mrf.mxu0
        %1518 = vmatprep.mubr.bf16.mxu0 0
        %1519 = vmatmul.mubr.bf16.gmra.mxu0 %v1326
        %v1520 = vpop.f32.mrf.mxu0
        %v1521 = vadd.f32 %v1273, %v1520
        %v1522 = vpop.f32.mrf.mxu0
        %v1523 = vpop.f32.mrf.mxu0
        %v1524 = vadd.f32 %v1273, %v1523
        %v1525 = vpop.f32.mrf.mxu0
        %1526 = vmatprep.mubr.bf16.mxu0 0
        %1527 = vmatmul.mubr.bf16.gmra.mxu0 %v1329
        %v1528 = vpop.f32.mrf.mxu0
        %v1529 = vadd.f32 %v1273, %v1528
        %v1530 = vpop.f32.mrf.mxu0
        %v1531 = vpop.f32.mrf.mxu0
        %v1532 = vadd.f32 %v1273, %v1531
        %v1533 = vpop.f32.mrf.mxu0
        %1534 = vmatprep.mubr.bf16.mxu0 0
        %1535 = vmatmul.mubr.bf16.gmra.mxu0 %v1332
        %v1536 = vpop.f32.mrf.mxu0
        %v1537 = vadd.f32 %v1273, %v1536
        %v1538 = vpop.f32.mrf.mxu0
        %v1539 = vpop.f32.mrf.mxu0
        %v1540 = vadd.f32 %v1273, %v1539
        %v1541 = vpop.f32.mrf.mxu0
        %1542 = vmatprep.mubr.bf16.mxu0 0
        %1543 = vmatmul.mubr.bf16.gmra.mxu0 %v1335
        %v1544 = vpop.f32.mrf.mxu0
        %v1545 = vadd.f32 %v1273, %v1544
        %v1546 = vpop.f32.mrf.mxu0
        %v1547 = vpop.f32.mrf.mxu0
        %v1548 = vadd.f32 %v1273, %v1547
        %v1549 = vpop.f32.mrf.mxu0
        %1550 = vmatprep.mubr.bf16.mxu0 0
        %1551 = vmatmul.mubr.bf16.gmra.mxu0 %v1338
        %v1552 = vpop.f32.mrf.mxu0
        %v1553 = vadd.f32 %v1273, %v1552
        %v1554 = vpop.f32.mrf.mxu0
        %v1555 = vpop.f32.mrf.mxu0
        %v1556 = vadd.f32 %v1273, %v1555
        %v1557 = vpop.f32.mrf.mxu0
        %1558 = vmatprep.mubr.bf16.mxu0 0
        %1559 = vmatmul.mubr.bf16.gmra.mxu0 %v1341
        %v1560 = vpop.f32.mrf.mxu0
        %v1561 = vadd.f32 %v1273, %v1560
        %v1562 = vpop.f32.mrf.mxu0
        %v1563 = vpop.f32.mrf.mxu0
        %v1564 = vadd.f32 %v1273, %v1563
        %v1565 = vpop.f32.mrf.mxu0
        %1566 = vmatprep.mubr.bf16.mxu0 0
        %1567 = vmatmul.mubr.bf16.gmra.mxu0 %v1344
        %v1568 = vpop.f32.mrf.mxu0
        %v1569 = vadd.f32 %v1273, %v1568
        %v1570 = vpop.f32.mrf.mxu0
        %v1571 = vpop.f32.mrf.mxu0
        %v1572 = vadd.f32 %v1273, %v1571
        %v1573 = vpop.f32.mrf.mxu0
        %1574 = vmatprep.mubr.bf16.mxu0 0
        %1575 = vmatmul.mubr.bf16.gmra.mxu0 %v1347
        %v1576 = vpop.f32.mrf.mxu0
        %v1577 = vadd.f32 %v1273, %v1576
        %v1578 = vpop.f32.mrf.mxu0
        %v1579 = vpop.f32.mrf.mxu0
        %v1580 = vadd.f32 %v1273, %v1579
        %v1581 = vpop.f32.mrf.mxu0
        %1582 = vmatprep.mubr.bf16.mxu0 0
        %1583 = vmatmul.mubr.bf16.gmra.mxu0 %v1350
        %v1584 = vpop.f32.mrf.mxu0
        %v1585 = vadd.f32 %v1273, %v1584
        %v1586 = vpop.f32.mrf.mxu0
        %v1587 = vpop.f32.mrf.mxu0
        %v1588 = vadd.f32 %v1273, %v1587
        %v1589 = vpop.f32.mrf.mxu0
        %1590 = vmatprep.mubr.bf16.mxu0 0
        %1591 = vmatmul.mubr.bf16.gmra.mxu0 %v1353
        %v1592 = vpop.f32.mrf.mxu0
        %v1593 = vadd.f32 %v1273, %v1592
        %v1594 = vpop.f32.mrf.mxu0
        %v1595 = vpop.f32.mrf.mxu0
        %v1596 = vadd.f32 %v1273, %v1595
        %v1597 = vpop.f32.mrf.mxu0
        %1598 = vmatprep.mubr.bf16.mxu0 0
        %1599 = vmatmul.mubr.bf16.gmra.mxu0 %v1356
        %v1600 = vpop.f32.mrf.mxu0
        %v1601 = vadd.f32 %v1273, %v1600
        %v1602 = vpop.f32.mrf.mxu0
        %v1603 = vpop.f32.mrf.mxu0
        %v1604 = vadd.f32 %v1273, %v1603
        %v1605 = vpop.f32.mrf.mxu0
        %1606 = vmatprep.mubr.bf16.mxu0 0
        %1607 = vmatmul.mubr.bf16.gmra.mxu0 %v1359
        %v1608 = vpop.f32.mrf.mxu0
        %v1609 = vadd.f32 %v1273, %v1608
        %v1610 = vpop.f32.mrf.mxu0
        %v1611 = vpop.f32.mrf.mxu0
        %v1612 = vadd.f32 %v1273, %v1611
        %v1613 = vpop.f32.mrf.mxu0
        %1614 = vmatprep.mubr.bf16.mxu0 0
        %1615 = vmatmul.mubr.bf16.gmra.mxu0 %v1362
        %v1616 = vpop.f32.mrf.mxu0
        %v1617 = vadd.f32 %v1273, %v1616
        %v1618 = vpop.f32.mrf.mxu0
        %v1619 = vpop.f32.mrf.mxu0
        %v1620 = vadd.f32 %v1273, %v1619
        %v1621 = vpop.f32.mrf.mxu0
        %1622 = vmatprep.mubr.bf16.mxu0 0
        %1623 = vmatmul.mubr.bf16.gmra.mxu0 %v1365
        %v1624 = vpop.f32.mrf.mxu0
        %v1625 = vadd.f32 %v1273, %v1624
        %v1626 = vpop.f32.mrf.mxu0
        %v1627 = vpop.f32.mrf.mxu0
        %v1628 = vadd.f32 %v1273, %v1627
        %v1629 = vpop.f32.mrf.mxu0
        %1630 = vmatprep.mubr.bf16.mxu0 0
        %1631 = vmatmul.mubr.bf16.gmra.mxu0 %v1368
        %v1632 = vpop.f32.mrf.mxu0
        %v1633 = vadd.f32 %v1273, %v1632
        %v1634 = vpop.f32.mrf.mxu0
        %v1635 = vpop.f32.mrf.mxu0
        %v1636 = vadd.f32 %v1273, %v1635
        %v1637 = vpop.f32.mrf.mxu0
        %1638 = vmatprep.mubr.bf16.mxu0 0
        %1639 = vmatmul.mubr.bf16.gmra.mxu0 %v1371
        %v1640 = vpop.f32.mrf.mxu0
        %v1641 = vadd.f32 %v1273, %v1640
        %v1642 = vpop.f32.mrf.mxu0
        %v1643 = vpop.f32.mrf.mxu0
        %v1644 = vadd.f32 %v1273, %v1643
        %v1645 = vpop.f32.mrf.mxu0
        %1646 = vmatprep.mubr.bf16.mxu0 0
        %1647 = vmatmul.mubr.bf16.gmra.mxu0 %v1374
        %v1648 = vpop.f32.mrf.mxu0
        %v1649 = vadd.f32 %v1273, %v1648
        %v1650 = vpop.f32.mrf.mxu0
        %v1651 = vpop.f32.mrf.mxu0
        %v1652 = vadd.f32 %v1273, %v1651
        %v1653 = vpop.f32.mrf.mxu0
        %1654 = vmatprep.mubr.bf16.mxu0 0
        %1655 = vmatmul.mubr.bf16.gmra.mxu0 %v1377
        %v1656 = vpop.f32.mrf.mxu0
        %v1657 = vadd.f32 %v1273, %v1656
        %v1658 = vpop.f32.mrf.mxu0
        %v1659 = vpop.f32.mrf.mxu0
        %v1660 = vadd.f32 %v1273, %v1659
        %v1661 = vpop.f32.mrf.mxu0
        %1662 = vmatprep.mubr.bf16.mxu0 0
        %1663 = vmatmul.mubr.bf16.gmra.mxu0 %v1380
        %v1664 = vpop.f32.mrf.mxu0
        %v1665 = vadd.f32 %v1273, %v1664
        %v1666 = vpop.f32.mrf.mxu0
        %v1667 = vpop.f32.mrf.mxu0
        %v1668 = vadd.f32 %v1273, %v1667
        %v1669 = vpop.f32.mrf.mxu0
        %1670 = vdwg.mxu0
        %1671 = vst [vmem:[%s164] sm:$0xff] %v1417
        %1672 = vst [vmem:[%s164 + $0x8] sm:$0xff] %v1420
        %1673 = vst [vmem:[%s164 + $0x10] sm:$0xff] %v1425
        %1674 = vst [vmem:[%s164 + $0x18] sm:$0xff] %v1428
        %1675 = vst [vmem:[%s164 + $0x20] sm:$0xff] %v1433
        %1676 = vst [vmem:[%s164 + $0x28] sm:$0xff] %v1436
        %1677 = vst [vmem:[%s164 + $0x30] sm:$0xff] %v1441
        %1678 = vst [vmem:[%s164 + $0x38] sm:$0xff] %v1444
        %1679 = vst [vmem:[%s164 + $0x40] sm:$0xff] %v1449
        %1680 = vst [vmem:[%s164 + $0x48] sm:$0xff] %v1452
        %1681 = vst [vmem:[%s164 + $0x50] sm:$0xff] %v1457
        %1682 = vst [vmem:[%s164 + $0x58] sm:$0xff] %v1460
        %1683 = vst [vmem:[%s164 + $0x60] sm:$0xff] %v1465
        %1684 = vst [vmem:[%s164 + $0x68] sm:$0xff] %v1468
        %1685 = vst [vmem:[%s164 + $0x70] sm:$0xff] %v1473
        %1686 = vst [vmem:[%s164 + $0x78] sm:$0xff] %v1476
        %1687 = vst [vmem:[%s164 + $0x80] sm:$0xff] %v1481
        %1688 = vst [vmem:[%s164 + $0x88] sm:$0xff] %v1484
        %1689 = vst [vmem:[%s164 + $0x90] sm:$0xff] %v1489
        %1690 = vst [vmem:[%s164 + $0x98] sm:$0xff] %v1492
        %1691 = vst [vmem:[%s164 + $0xa0] sm:$0xff] %v1497
        %1692 = vst [vmem:[%s164 + $0xa8] sm:$0xff] %v1500
        %1693 = vst [vmem:[%s164 + $0xb0] sm:$0xff] %v1505
        %1694 = vst [vmem:[%s164 + $0xb8] sm:$0xff] %v1508
        %1695 = vst [vmem:[%s164 + $0xc0] sm:$0xff] %v1513
        %1696 = vst [vmem:[%s164 + $0xc8] sm:$0xff] %v1516
        %1697 = vst [vmem:[%s164 + $0xd0] sm:$0xff] %v1521
        %1698 = vst [vmem:[%s164 + $0xd8] sm:$0xff] %v1524
        %1699 = vst [vmem:[%s164 + $0xe0] sm:$0xff] %v1529
        %1700 = vst [vmem:[%s164 + $0xe8] sm:$0xff] %v1532
        %1701 = vst [vmem:[%s164 + $0xf0] sm:$0xff] %v1537
        %1702 = vst [vmem:[%s164 + $0xf8] sm:$0xff] %v1540
        %1703 = vst [vmem:[%s164 + $0x100] sm:$0xff] %v1545
        %1704 = vst [vmem:[%s164 + $0x108] sm:$0xff] %v1548
        %1705 = vst [vmem:[%s164 + $0x110] sm:$0xff] %v1553
        %1706 = vst [vmem:[%s164 + $0x118] sm:$0xff] %v1556
        %1707 = vst [vmem:[%s164 + $0x120] sm:$0xff] %v1561
        %1708 = vst [vmem:[%s164 + $0x128] sm:$0xff] %v1564
        %1709 = vst [vmem:[%s164 + $0x130] sm:$0xff] %v1569
        %1710 = vst [vmem:[%s164 + $0x138] sm:$0xff] %v1572
        %1711 = vst [vmem:[%s164 + $0x140] sm:$0xff] %v1577
        %1712 = vst [vmem:[%s164 + $0x148] sm:$0xff] %v1580
        %1713 = vst [vmem:[%s164 + $0x150] sm:$0xff] %v1585
        %1714 = vst [vmem:[%s164 + $0x158] sm:$0xff] %v1588
        %1715 = vst [vmem:[%s164 + $0x160] sm:$0xff] %v1593
        %1716 = vst [vmem:[%s164 + $0x168] sm:$0xff] %v1596
        %1717 = vst [vmem:[%s164 + $0x170] sm:$0xff] %v1601
        %1718 = vst [vmem:[%s164 + $0x178] sm:$0xff] %v1604
        %1719 = vst [vmem:[%s164 + $0x180] sm:$0xff] %v1609
        %1720 = vst [vmem:[%s164 + $0x188] sm:$0xff] %v1612
        %1721 = vst [vmem:[%s164 + $0x190] sm:$0xff] %v1617
        %1722 = vst [vmem:[%s164 + $0x198] sm:$0xff] %v1620
        %1723 = vst [vmem:[%s164 + $0x1a0] sm:$0xff] %v1625
        %1724 = vst [vmem:[%s164 + $0x1a8] sm:$0xff] %v1628
        %1725 = vst [vmem:[%s164 + $0x1b0] sm:$0xff] %v1633
        %1726 = vst [vmem:[%s164 + $0x1b8] sm:$0xff] %v1636
        %1727 = vst [vmem:[%s164 + $0x1c0] sm:$0xff] %v1641
        %1728 = vst [vmem:[%s164 + $0x1c8] sm:$0xff] %v1644
        %1729 = vst [vmem:[%s164 + $0x1d0] sm:$0xff] %v1649
        %1730 = vst [vmem:[%s164 + $0x1d8] sm:$0xff] %v1652
        %1731 = vst [vmem:[%s164 + $0x1e0] sm:$0xff] %v1657
        %1732 = vst [vmem:[%s164 + $0x1e8] sm:$0xff] %v1660
        %1733 = vst [vmem:[%s164 + $0x1f0] sm:$0xff] %v1665
        %1734 = vst [vmem:[%s164 + $0x1f8] sm:$0xff] %v1668
        %s1735 = sand.u32 %s93, 1
        %s1736 = scalar_lea.sflag [#allocation3], %s1735
        %s1737 = sand.u32 %s93, 1
        %s1738 = smul.addr %s1737, 512
        %s1739 = scalar_lea.vmem [#allocation2], %s1738
        // Predicated region
        $region33: #{tpu_custom_call.1} parent=31 // pred_check
          %p1740 = pneg %p103
        $region34: #{tpu_custom_call.1} parent=31 // pred_check_branch
          %1742 = sbr.rel (%p1740) target = $region36
        $region35: #{tpu_custom_call.1} parent=31 // pred_region
          %s1743 = smul.u32 64, %s17
          %s1745 = ssub.s32 8192, 8192
          %1746 = vsyncadd %s1736, %s1745
          %s1747 = smul.addr %s1743, 128
          %s1748 = scalar_lea.hbm %s3, %s1747
          %s1749 = sshll.u32 %s1739, 4
          %s1750 = int_to_ptr.vmem [resolvable:$true] %s1749
          %1755 = dma.vmem_to_hbm [thread:$0]  %s1750, 8192, %s1748, %s1736, 128, 128, 8
        $region36: #{tpu_custom_call.1} parent=31 // pred_fallthru
          _
      $region32: #{tpu_custom_call.1} parent=5 // pred_fallthru
        _
      %p1756 = scmp.le.s32.totalorder 2, %s12
      // Predicated region
      $region37: #{tpu_custom_call.1} parent=5 // pred_check
        %p1757 = pneg %p1756
      $region38: #{tpu_custom_call.1} parent=5 // pred_check_branch
        %1759 = sbr.rel (%p1757) target = $region40
      $region39: #{tpu_custom_call.1} parent=5 // pred_region
        %s1760 = ssub.s32 %s12, 2
        // Predicated region
        $region41: #{tpu_custom_call.1} parent=39 // pred_check
          %p1761 = pneg %p109
        $region42: #{tpu_custom_call.1} parent=39 // pred_check_branch
          %1763 = sbr.rel (%p1761) target = $region44
        $region43: #{tpu_custom_call.1} parent=39 // pred_region
          %s1764 = sand.u32 %s94, 1
          %s1765 = scalar_lea.sflag [#allocation3], %s1764
          %s1766 = sand.u32 %s94, 1
          %s1767 = smul.addr %s1766, 512
          %s1768 = scalar_lea.vmem [#allocation2], %s1767
          %1769 = dma.done %s1765, 8192
        $region44: #{tpu_custom_call.1} parent=39 // pred_fallthru
          _
      $region40: #{tpu_custom_call.1} parent=5 // pred_fallthru
        _
    $region6: #{tpu_custom_call.1} parent=1 // loop_footer
      %s16 = sadd.s32 1, %s12
    $region7: #{tpu_custom_call.1} parent=1 // loop_footer_branch
      %11 = sbr.rel target = $region3
    $region8: #{tpu_custom_call.1} parent=1 // loop_exit
      _
    %1770 = vsyncpa [#allocation3], 1
    %s1771 = scalar_lea.sflag [#allocation3], 1
    %1772 = vsyncpa %s1771, 1

</llo_original>
